<compile_context>
chip_gen: v6e
topology: v6e:2x2x1
jax: 0.10.0
libtpu: 0.0.40
codegen_flags: <defaults>
</compile_context>

<pallas_src>
import functools

import numpy as np
import jax
import jax.numpy as jnp
from jax.experimental import pallas as pl
from jax.experimental.pallas import tpu as pltpu


# ----------------------------------------------------------------------------
# Fused attention kernel: projections + per-head attention + out projection.
# ----------------------------------------------------------------------------

def _fused_chart_attn_kernel(num_heads, head_dim,
                             q_ref, k_ref, v_ref,
                             wq_ref, wk_ref, wv_ref, bqkv_ref,
                             wo_ref, bo_ref, chart_ref, pad_ref,
                             out_ref, wts_ref, ah_ref):
    # Per-batch block: q/k/v (1, S, H) bf16; weights shared across the grid.
    xq = q_ref[0]                                   # (S, H) bf16
    xk = k_ref[0]
    xv = v_ref[0]

    # Full-width projections (K = N = H keeps the MXU fed); f32 accumulation.
    # The 1/sqrt(head_dim) scale is already folded into Wq and bq.
    q = jnp.dot(xq, wq_ref[...], preferred_element_type=jnp.float32) + bqkv_ref[0]
    k = jnp.dot(xk, wk_ref[...], preferred_element_type=jnp.float32) + bqkv_ref[1]
    v = jnp.dot(xv, wv_ref[...], preferred_element_type=jnp.float32) + bqkv_ref[2]

    # Additive bias = shared chart bias (S,S) + per-batch padding penalty (1,S).
    # Padding uses a finite -1e30 (no -inf -> NaN hazard on heavily masked rows).
    bias = chart_ref[...] + pad_ref[0]              # (S, S) f32, broadcast add

    # TODO(synk): head_dim-deep score/PV contractions under-feed the MXU on all
    # chips; this is inherent to multi-head semantics at these shapes.
    # NH is small and static; static lane slices keep loads/stores simple.
    for h in range(num_heads):
        lo, hi = h * head_dim, (h + 1) * head_dim
        qh = q[:, lo:hi].astype(jnp.bfloat16)       # (S, d)
        kh = k[:, lo:hi].astype(jnp.bfloat16)
        vh = v[:, lo:hi].astype(jnp.bfloat16)

        # scores = q @ k^T (already scaled) + bias   (contract last dims; no .T)
        s = jax.lax.dot_general(qh, kh, (((1,), (1,)), ((), ())),
                                preferred_element_type=jnp.float32)
        s = s + bias

        m = jnp.max(s, axis=-1, keepdims=True)
        p = jnp.exp(s - m)
        denom = jnp.sum(p, axis=-1, keepdims=True)
        # approx reciprocal goes to the EUP slot (~free); the bf16 weight
        # writeback already quantizes below the ~1e-3 approx error.
        w = p * pl.reciprocal(denom, approx=True)
        wts_ref[0, h] = w.astype(wts_ref.dtype)     # bf16 attention weights out

        ah = jnp.dot(w.astype(jnp.bfloat16), vh,
                     preferred_element_type=jnp.float32)      # (S, d)
        ah_ref[:, lo:hi] = ah.astype(jnp.bfloat16)  # concat heads in VMEM scratch

    # Single full-width out-projection (contraction depth H, not head_dim).
    out_ref[0] = (jnp.dot(ah_ref[...], wo_ref[...],
                          preferred_element_type=jnp.float32) + bo_ref[...])


# ----------------------------------------------------------------------------
# VMEM budgeting (explicit, from block-size arithmetic).
# ----------------------------------------------------------------------------

def _tile_padded_bytes(shape, dtype):
    itemsize = jnp.dtype(dtype).itemsize
    sublane = {4: 8, 2: 16, 1: 32}.get(itemsize, 8)
    dims = list(shape)
    if dims:
        dims[-1] = -(-dims[-1] // 128) * 128
    if len(dims) >= 2:
        dims[-2] = -(-dims[-2] // sublane) * sublane
    n = 1
    for d in dims:
        n *= d
    return n * itemsize


def _vmem_limit_bytes(S, H, num_heads, weights_dtype):
    dbl = 2  # pipeline double-buffering
    est = 0
    est += dbl * 3 * _tile_padded_bytes((1, S, H), jnp.bfloat16)          # q/k/v
    est += dbl * 3 * _tile_padded_bytes((H, H), jnp.bfloat16)             # Wq/Wk/Wv
    est += dbl * _tile_padded_bytes((H, H), jnp.bfloat16)                 # Wo
    est += dbl * _tile_padded_bytes((3, 1, H), jnp.float32)               # qkv biases
    est += dbl * _tile_padded_bytes((1, H), jnp.float32)                  # out bias
    est += dbl * _tile_padded_bytes((S, S), jnp.float32)                  # chart bias
    est += dbl * _tile_padded_bytes((1, 1, S), jnp.float32)               # pad penalty
    est += dbl * _tile_padded_bytes((1, S, H), jnp.float32)               # output
    est += dbl * _tile_padded_bytes((1, num_heads, S, S), weights_dtype)  # attn wts
    est += _tile_padded_bytes((S, H), jnp.bfloat16)                       # ah scratch
    # Generous headroom for compiler-internal scratch; stay within v7x's 64 MiB.
    return int(min(max(2 * est + (4 << 20), 16 << 20), 64 << 20))


# ----------------------------------------------------------------------------
# pallas_call wrapper.
# ----------------------------------------------------------------------------

def fused_chart_attention(query, key, value, wq, wk, wv, bqkv, wo, bo,
                          chart_bias, pad_bias, *, num_heads,
                          weights_dtype=jnp.bfloat16):
    B, S, H = query.shape
    head_dim = H // num_heads
    kernel = functools.partial(_fused_chart_attn_kernel, num_heads, head_dim)

    return pl.pallas_call(
        kernel,
        out_shape=(jax.ShapeDtypeStruct((B, S, H), jnp.float32),
                   jax.ShapeDtypeStruct((B, num_heads, S, S), weights_dtype)),
        grid=(B,),
        in_specs=[
            pl.BlockSpec((1, S, H), lambda b: (b, 0, 0)),          # query (bf16)
            pl.BlockSpec((1, S, H), lambda b: (b, 0, 0)),          # key   (bf16)
            pl.BlockSpec((1, S, H), lambda b: (b, 0, 0)),          # value (bf16)
            pl.BlockSpec((H, H), lambda b: (0, 0)),                # Wq (scale folded)
            pl.BlockSpec((H, H), lambda b: (0, 0)),                # Wk
            pl.BlockSpec((H, H), lambda b: (0, 0)),                # Wv
            pl.BlockSpec((3, 1, H), lambda b: (0, 0, 0)),          # q/k/v biases
            pl.BlockSpec((H, H), lambda b: (0, 0)),                # Wo (in, out)
            pl.BlockSpec((1, H), lambda b: (0, 0)),                # out bias
            pl.BlockSpec((S, S), lambda b: (0, 0)),                # chart bias (shared)
            pl.BlockSpec((1, 1, S), lambda b: (b, 0, 0)),          # padding penalty
        ],
        out_specs=(pl.BlockSpec((1, S, H), lambda b: (b, 0, 0)),
                   # TODO(synk): last dim S < 128 lowers to masked stores at the
                   # demo shape; lane-dense automatically once S >= 128.
                   pl.BlockSpec((1, num_heads, S, S), lambda b: (b, 0, 0, 0))),
        scratch_shapes=[pltpu.VMEM((S, H), jnp.bfloat16)],         # concat'd heads
        compiler_params=pltpu.CompilerParams(
            dimension_semantics=("parallel",),
            vmem_limit_bytes=_vmem_limit_bytes(S, H, num_heads, weights_dtype)),
    )(query, key, value, wq, wk, wv, bqkv, wo, bo, chart_bias, pad_bias)


# ----------------------------------------------------------------------------
# Module: parameters (preprocessed once) + chart-bias construction + glue.
# ----------------------------------------------------------------------------

class ChartAwareAttentionPallas:
    def __init__(self, hidden_size: int, num_heads: int, key,
                 weights_dtype=jnp.bfloat16):
        assert hidden_size % num_heads == 0
        self.hidden_size = hidden_size
        self.num_heads = num_heads
        self.head_dim = hidden_size // num_heads
        self.weights_dtype = weights_dtype
        H = hidden_size
        scale = 1.0 / float(self.head_dim) ** 0.5

        keys = jax.random.split(key, 10)
        w = lambda k, shape: 0.02 * jax.random.normal(k, shape, jnp.float32)
        # torch nn.Linear stores weight as (out, in); pre-transpose to (in, out),
        # fold 1/sqrt(head_dim) into Wq/bq, cast weights to bf16 ONCE here.
        wq = w(keys[0], (H, H)); bq = w(keys[1], (H,))
        wk = w(keys[2], (H, H)); bk = w(keys[3], (H,))
        wv = w(keys[4], (H, H)); bv = w(keys[5], (H,))
        wo = w(keys[6], (H, H)); bo = w(keys[7], (H,))

        self.wq = jnp.asarray(wq.T * scale, jnp.bfloat16)
        self.wk = jnp.asarray(wk.T, jnp.bfloat16)
        self.wv = jnp.asarray(wv.T, jnp.bfloat16)
        self.wo = jnp.asarray(wo.T, jnp.bfloat16)                  # plain (H, H)
        self.bqkv = jnp.stack([bq * scale, bk, bv], axis=0).reshape(3, 1, H)
        self.bo = bo.reshape(1, H)

        # TODO(synk): reference defines pattern_detector = Linear(H, 5) but never
        # uses it in forward(); parameters are intentionally omitted here.
        # TODO(synk): flash_attn_func path is CUDA-only; on TPU the reference
        # falls back to the explicit softmax path, which is what is fused above.

        self._bias_cache = {}

    # -- forward -------------------------------------------------------------
    def __call__(self, query, key, value, chart_type=None, key_regions=None,
                 key_padding_mask=None):
        del key_regions  # unused by the reference forward as well
        B, S, H = query.shape

        # Compact bias operands: shared (S,S) chart bias + per-batch (B,1,S)
        # finite padding penalty (-1e30 instead of -inf -> no NaN rows).
        chart_bias = self._get_chart_bias(chart_type, S)
        if chart_bias is None:
            chart_bias = jnp.zeros((S, S), jnp.float32)
        if key_padding_mask is not None:
            pad_bias = jnp.where(key_padding_mask, -1e30, 0.0).astype(jnp.float32)
            pad_bias = pad_bias.reshape(B, 1, S)
        else:
            pad_bias = jnp.zeros((B, 1, S), jnp.float32)

        # bf16 activations (halves activation DMA; MXU consumes bf16 anyway).
        qb = query.astype(jnp.bfloat16)
        kb = key.astype(jnp.bfloat16)
        vb = value.astype(jnp.bfloat16)

        output, attn_weights = fused_chart_attention(
            qb, kb, vb,
            self.wq, self.wk, self.wv, self.bqkv, self.wo, self.bo,
            chart_bias, pad_bias,
            num_heads=self.num_heads, weights_dtype=self.weights_dtype)
        return output, attn_weights

    # -- chart biases (host-side, cached per (chart_type, seq_len)) -----------
    def _get_chart_bias(self, chart_type, seq_len):
        if chart_type is None:
            return None
        cache_key = (chart_type, seq_len)
        if cache_key in self._bias_cache:
            return self._bias_cache[cache_key]
        builders = {
            'bar_chart': self._create_grid_bias,
            'line_chart': self._create_sequential_bias,
            'pie_chart': self._create_radial_bias,
            'scatter_plot': self._create_local_bias,
            'heatmap': self._create_block_bias,
        }
        if chart_type not in builders:
            self._bias_cache[cache_key] = None
            return None
        bias = jnp.asarray(builders[chart_type](seq_len))
        self._bias_cache[cache_key] = bias
        return bias

    @staticmethod
    def _create_grid_bias(seq_len):
        bias = np.zeros((seq_len, seq_len), np.float32)
        grid_size = int(seq_len ** 0.5)
        for i in range(seq_len):
            row, col = i // grid_size, i % grid_size
            for j in range(row * grid_size, (row + 1) * grid_size):
                if j < seq_len:
                    bias[i, j] = 0.1
            for j in range(col, seq_len, grid_size):
                bias[i, j] = 0.1
        return bias

    @staticmethod
    def _create_sequential_bias(seq_len):
        bias = np.zeros((seq_len, seq_len), np.float32)
        for i in range(seq_len):
            for j in range(max(0, i - 2), min(seq_len, i + 3)):
                bias[i, j] = 0.2 / (abs(i - j) + 1)
        return bias

    @staticmethod
    def _create_radial_bias(seq_len):
        bias = np.zeros((seq_len, seq_len), np.float32)
        center = seq_len // 2
        for i in range(seq_len):
            bias[i, center] = 0.2
            bias[i, (i - 1) % seq_len] = 0.1
            bias[i, (i + 1) % seq_len] = 0.1
        return bias

    @staticmethod
    def _create_local_bias(seq_len):
        bias = np.zeros((seq_len, seq_len), np.float32)
        window = max(3, seq_len // 10)
        for i in range(seq_len):
            for j in range(max(0, i - window), min(seq_len, i + window + 1)):
                bias[i, j] = 0.15 / (abs(i - j) + 1)
        return bias

    @staticmethod
    def _create_block_bias(seq_len):
        bias = np.zeros((seq_len, seq_len), np.float32)
        block_size = max(4, seq_len // 8)
        for i in range(seq_len):
            bs = i // block_size * block_size
            be = min(seq_len, bs + block_size)
            for j in range(bs, be):
                bias[i, j] = 0.1
        return bias


# ----------------------------------------------------------------------------
# Demo
# ----------------------------------------------------------------------------

if __name__ == "__main__":
    root = jax.random.PRNGKey(0)
    k_params, k_q, k_k, k_v = jax.random.split(root, 4)

    B, S, H, NH = 2, 16, 32, 4
    attn = ChartAwareAttentionPallas(H, NH, k_params)

    query = jax.random.normal(k_q, (B, S, H), jnp.float32)
    key_t = jax.random.normal(k_k, (B, S, H), jnp.float32)
    value = jax.random.normal(k_v, (B, S, H), jnp.float32)
    # Pad the last 3 key positions of batch element 1 (no fully-masked rows).
    key_padding_mask = jnp.zeros((B, S), jnp.bool_).at[1, -3:].set(True)

    output, attn_weights = attn(query, key_t, value,
                                chart_type="line_chart",
                                key_padding_mask=key_padding_mask)
    output = jax.block_until_ready(output)
    attn_weights = jax.block_until_ready(attn_weights)

    assert output.shape == (B, S, H), output.shape
    assert output.dtype == jnp.float32, output.dtype
    assert attn_weights.shape == (B, NH, S, S), attn_weights.shape
    assert bool(jnp.all(jnp.isfinite(output)))
    assert bool(jnp.all(jnp.isfinite(attn_weights.astype(jnp.float32))))
    # Softmax rows over padded keys must be ~0.
    assert float(jnp.max(attn_weights[1, :, :, -3:].astype(jnp.float32))) < 1e-3
    print("KERNEL_OK")
</pallas_src>

<mosaic_0001>
module attributes {stable_mosaic.version = 11 : i64} {
  func.func @_fused_chart_attn_kernel(%arg0: i32, %arg1: memref<1x16x32xbf16, #tpu.memory_space<vmem>>, %arg2: memref<1x16x32xbf16, #tpu.memory_space<vmem>>, %arg3: memref<1x16x32xbf16, #tpu.memory_space<vmem>>, %arg4: memref<32x32xbf16, #tpu.memory_space<vmem>>, %arg5: memref<32x32xbf16, #tpu.memory_space<vmem>>, %arg6: memref<32x32xbf16, #tpu.memory_space<vmem>>, %arg7: memref<3x1x32xf32, #tpu.memory_space<vmem>>, %arg8: memref<32x32xbf16, #tpu.memory_space<vmem>>, %arg9: memref<1x32xf32, #tpu.memory_space<vmem>>, %arg10: memref<16x16xf32, #tpu.memory_space<vmem>>, %arg11: memref<1x1x16xf32, #tpu.memory_space<vmem>>, %arg12: memref<1x16x32xf32, #tpu.memory_space<vmem>>, %arg13: memref<1x4x16x16xbf16, #tpu.memory_space<vmem>>, %arg14: memref<16x32xbf16, #tpu.memory_space<vmem>>) attributes {dimension_semantics = [#tpu.dimension_semantics<parallel>], iteration_bounds = array<i64: 2>, scalar_prefetch = 0 : i64, scratch_operands = 1 : i64, tpu.core_type = #tpu.core_type<tc>, window_params = [{transform_indices = @transform_0, window_bounds = array<i64: 1, 16, 32>}, {transform_indices = @transform_1, window_bounds = array<i64: 1, 16, 32>}, {transform_indices = @transform_2, window_bounds = array<i64: 1, 16, 32>}, {pipeline_mode = #tpu.pipeline_mode<synchronous>, transform_indices = @transform_3, window_bounds = array<i64: 32, 32>}, {pipeline_mode = #tpu.pipeline_mode<synchronous>, transform_indices = @transform_4, window_bounds = array<i64: 32, 32>}, {pipeline_mode = #tpu.pipeline_mode<synchronous>, transform_indices = @transform_5, window_bounds = array<i64: 32, 32>}, {pipeline_mode = #tpu.pipeline_mode<synchronous>, transform_indices = @transform_6, window_bounds = array<i64: 3, 1, 32>}, {pipeline_mode = #tpu.pipeline_mode<synchronous>, transform_indices = @transform_7, window_bounds = array<i64: 32, 32>}, {pipeline_mode = #tpu.pipeline_mode<synchronous>, transform_indices = @transform_8, window_bounds = array<i64: 1, 32>}, {pipeline_mode = #tpu.pipeline_mode<synchronous>, transform_indices = @transform_9, window_bounds = array<i64: 16, 16>}, {transform_indices = @transform_10, window_bounds = array<i64: 1, 1, 16>}, {transform_indices = @transform_11, window_bounds = array<i64: 1, 16, 32>}, {transform_indices = @transform_12, window_bounds = array<i64: 1, 4, 16, 16>}]} {
    %c0 = arith.constant 0 : index
    %c0_0 = arith.constant 0 : index
    %c0_1 = arith.constant 0 : index
    %0 = vector.load %arg1[%c0, %c0_0, %c0_1] : memref<1x16x32xbf16, #tpu.memory_space<vmem>>, vector<1x16x32xbf16>
    %1 = vector.shape_cast %0 : vector<1x16x32xbf16> to vector<16x32xbf16>
    %c0_2 = arith.constant 0 : index
    %c0_3 = arith.constant 0 : index
    %c0_4 = arith.constant 0 : index
    %2 = vector.load %arg2[%c0_2, %c0_3, %c0_4] : memref<1x16x32xbf16, #tpu.memory_space<vmem>>, vector<1x16x32xbf16>
    %3 = vector.shape_cast %2 : vector<1x16x32xbf16> to vector<16x32xbf16>
    %c0_5 = arith.constant 0 : index
    %c0_6 = arith.constant 0 : index
    %c0_7 = arith.constant 0 : index
    %4 = vector.load %arg3[%c0_5, %c0_6, %c0_7] : memref<1x16x32xbf16, #tpu.memory_space<vmem>>, vector<1x16x32xbf16>
    %5 = vector.shape_cast %4 : vector<1x16x32xbf16> to vector<16x32xbf16>
    %c0_8 = arith.constant 0 : index
    %c0_9 = arith.constant 0 : index
    %6 = vector.load %arg4[%c0_8, %c0_9] : memref<32x32xbf16, #tpu.memory_space<vmem>>, vector<32x32xbf16>
    %cst = arith.constant dense<0.000000e+00> : vector<16x32xf32>
    %7 = tpu.matmul %1, %6, %cst {dimension_numbers = #tpu.dot_dimension_numbers<[1], [0], [0], [1], [0, 0, 1, 1], [], []>} : vector<16x32xbf16>, vector<32x32xbf16>, vector<16x32xf32> -> vector<16x32xf32>
    %c0_10 = arith.constant 0 : index
    %c0_11 = arith.constant 0 : index
    %c0_12 = arith.constant 0 : index
    %8 = vector.load %arg7[%c0_10, %c0_11, %c0_12] : memref<3x1x32xf32, #tpu.memory_space<vmem>>, vector<1x1x32xf32>
    %9 = vector.shape_cast %8 : vector<1x1x32xf32> to vector<1x32xf32>
    %10 = vector.broadcast %9 : vector<1x32xf32> to vector<16x32xf32>
    %11 = arith.addf %7, %10 : vector<16x32xf32>
    %c0_13 = arith.constant 0 : index
    %c0_14 = arith.constant 0 : index
    %12 = vector.load %arg5[%c0_13, %c0_14] : memref<32x32xbf16, #tpu.memory_space<vmem>>, vector<32x32xbf16>
    %cst_15 = arith.constant dense<0.000000e+00> : vector<16x32xf32>
    %13 = tpu.matmul %3, %12, %cst_15 {dimension_numbers = #tpu.dot_dimension_numbers<[1], [0], [0], [1], [0, 0, 1, 1], [], []>} : vector<16x32xbf16>, vector<32x32xbf16>, vector<16x32xf32> -> vector<16x32xf32>
    %c1 = arith.constant 1 : index
    %c0_16 = arith.constant 0 : index
    %c0_17 = arith.constant 0 : index
    %14 = vector.load %arg7[%c1, %c0_16, %c0_17] : memref<3x1x32xf32, #tpu.memory_space<vmem>>, vector<1x1x32xf32>
    %15 = vector.shape_cast %14 : vector<1x1x32xf32> to vector<1x32xf32>
    %16 = vector.broadcast %15 : vector<1x32xf32> to vector<16x32xf32>
    %17 = arith.addf %13, %16 : vector<16x32xf32>
    %c0_18 = arith.constant 0 : index
    %c0_19 = arith.constant 0 : index
    %18 = vector.load %arg6[%c0_18, %c0_19] : memref<32x32xbf16, #tpu.memory_space<vmem>>, vector<32x32xbf16>
    %cst_20 = arith.constant dense<0.000000e+00> : vector<16x32xf32>
    %19 = tpu.matmul %5, %18, %cst_20 {dimension_numbers = #tpu.dot_dimension_numbers<[1], [0], [0], [1], [0, 0, 1, 1], [], []>} : vector<16x32xbf16>, vector<32x32xbf16>, vector<16x32xf32> -> vector<16x32xf32>
    %c2 = arith.constant 2 : index
    %c0_21 = arith.constant 0 : index
    %c0_22 = arith.constant 0 : index
    %20 = vector.load %arg7[%c2, %c0_21, %c0_22] : memref<3x1x32xf32, #tpu.memory_space<vmem>>, vector<1x1x32xf32>
    %21 = vector.shape_cast %20 : vector<1x1x32xf32> to vector<1x32xf32>
    %22 = vector.broadcast %21 : vector<1x32xf32> to vector<16x32xf32>
    %23 = arith.addf %19, %22 : vector<16x32xf32>
    %c0_23 = arith.constant 0 : index
    %c0_24 = arith.constant 0 : index
    %24 = vector.load %arg10[%c0_23, %c0_24] : memref<16x16xf32, #tpu.memory_space<vmem>>, vector<16x16xf32>
    %c0_25 = arith.constant 0 : index
    %c0_26 = arith.constant 0 : index
    %c0_27 = arith.constant 0 : index
    %25 = vector.load %arg11[%c0_25, %c0_26, %c0_27] : memref<1x1x16xf32, #tpu.memory_space<vmem>>, vector<1x1x16xf32>
    %26 = vector.shape_cast %25 : vector<1x1x16xf32> to vector<1x16xf32>
    %27 = vector.broadcast %26 : vector<1x16xf32> to vector<16x16xf32>
    %28 = arith.addf %24, %27 : vector<16x16xf32>
    %29 = vector.extract_strided_slice %11 {offsets = [0, 0], sizes = [16, 8], strides = [1, 1]} : vector<16x32xf32> to vector<16x8xf32>
    %30 = arith.truncf %29 : vector<16x8xf32> to vector<16x8xbf16>
    %31 = vector.extract_strided_slice %17 {offsets = [0, 0], sizes = [16, 8], strides = [1, 1]} : vector<16x32xf32> to vector<16x8xf32>
    %32 = arith.truncf %31 : vector<16x8xf32> to vector<16x8xbf16>
    %33 = vector.extract_strided_slice %23 {offsets = [0, 0], sizes = [16, 8], strides = [1, 1]} : vector<16x32xf32> to vector<16x8xf32>
    %34 = arith.truncf %33 : vector<16x8xf32> to vector<16x8xbf16>
    %cst_28 = arith.constant dense<0.000000e+00> : vector<16x16xf32>
    %35 = tpu.matmul %30, %32, %cst_28 {dimension_numbers = #tpu.dot_dimension_numbers<[1], [1], [0], [0], [0, 0, 1, 0], [], []>} : vector<16x8xbf16>, vector<16x8xbf16>, vector<16x16xf32> -> vector<16x16xf32>
    %36 = arith.addf %35, %28 : vector<16x16xf32>
    %cst_29 = arith.constant dense<0xFF800000> : vector<16xf32>
    %37 = vector.multi_reduction <maximumf>, %36, %cst_29 [1] : vector<16x16xf32> to vector<16xf32>
    %38 = vector.shape_cast %37 : vector<16xf32> to vector<16x1xf32>
    %39 = vector.broadcast %38 : vector<16x1xf32> to vector<16x16xf32>
    %40 = arith.subf %36, %39 : vector<16x16xf32>
    %41 = math.exp %40 : vector<16x16xf32>
    %cst_30 = arith.constant dense<0.000000e+00> : vector<16xf32>
    %42 = vector.multi_reduction <add>, %41, %cst_30 [1] : vector<16x16xf32> to vector<16xf32>
    %43 = vector.shape_cast %42 : vector<16xf32> to vector<16x1xf32>
    %44 = tpu.reciprocal %43 {approx = true} : vector<16x1xf32> -> vector<16x1xf32>
    %45 = vector.broadcast %44 : vector<16x1xf32> to vector<16x16xf32>
    %46 = arith.mulf %41, %45 : vector<16x16xf32>
    %47 = arith.truncf %46 : vector<16x16xf32> to vector<16x16xbf16>
    %c0_31 = arith.constant 0 : index
    %c0_32 = arith.constant 0 : index
    %c0_33 = arith.constant 0 : index
    %c0_34 = arith.constant 0 : index
    %48 = vector.load %arg13[%c0_31, %c0_32, %c0_33, %c0_34] : memref<1x4x16x16xbf16, #tpu.memory_space<vmem>>, vector<1x1x16x16xbf16>
    %49 = vector.shape_cast %48 : vector<1x1x16x16xbf16> to vector<16x16xbf16>
    %50 = vector.shape_cast %47 : vector<16x16xbf16> to vector<1x1x16x16xbf16>
    tpu.vector_store %arg13[%c0_31, %c0_32, %c0_33, %c0_34], %50 {strides = array<i32>} : memref<1x4x16x16xbf16, #tpu.memory_space<vmem>>, vector<1x1x16x16xbf16>,
    %51 = arith.truncf %46 : vector<16x16xf32> to vector<16x16xbf16>
    %cst_35 = arith.constant dense<0.000000e+00> : vector<16x8xf32>
    %52 = tpu.matmul %51, %34, %cst_35 {dimension_numbers = #tpu.dot_dimension_numbers<[1], [0], [0], [1], [0, 0, 1, 1], [], []>} : vector<16x16xbf16>, vector<16x8xbf16>, vector<16x8xf32> -> vector<16x8xf32>
    %53 = arith.truncf %52 : vector<16x8xf32> to vector<16x8xbf16>
    %c0_36 = arith.constant 0 : index
    %c0_37 = arith.constant 0 : index
    %54 = vector.load %arg14[%c0_36, %c0_37] : memref<16x32xbf16, #tpu.memory_space<vmem>>, vector<16x8xbf16>
    tpu.vector_store %arg14[%c0_36, %c0_37], %53 {strides = array<i32>} : memref<16x32xbf16, #tpu.memory_space<vmem>>, vector<16x8xbf16>,
    %55 = vector.extract_strided_slice %11 {offsets = [0, 8], sizes = [16, 8], strides = [1, 1]} : vector<16x32xf32> to vector<16x8xf32>
    %56 = arith.truncf %55 : vector<16x8xf32> to vector<16x8xbf16>
    %57 = vector.extract_strided_slice %17 {offsets = [0, 8], sizes = [16, 8], strides = [1, 1]} : vector<16x32xf32> to vector<16x8xf32>
    %58 = arith.truncf %57 : vector<16x8xf32> to vector<16x8xbf16>
    %59 = vector.extract_strided_slice %23 {offsets = [0, 8], sizes = [16, 8], strides = [1, 1]} : vector<16x32xf32> to vector<16x8xf32>
    %60 = arith.truncf %59 : vector<16x8xf32> to vector<16x8xbf16>
    %cst_38 = arith.constant dense<0.000000e+00> : vector<16x16xf32>
    %61 = tpu.matmul %56, %58, %cst_38 {dimension_numbers = #tpu.dot_dimension_numbers<[1], [1], [0], [0], [0, 0, 1, 0], [], []>} : vector<16x8xbf16>, vector<16x8xbf16>, vector<16x16xf32> -> vector<16x16xf32>
    %62 = arith.addf %61, %28 : vector<16x16xf32>
    %cst_39 = arith.constant dense<0xFF800000> : vector<16xf32>
    %63 = vector.multi_reduction <maximumf>, %62, %cst_39 [1] : vector<16x16xf32> to vector<16xf32>
    %64 = vector.shape_cast %63 : vector<16xf32> to vector<16x1xf32>
    %65 = vector.broadcast %64 : vector<16x1xf32> to vector<16x16xf32>
    %66 = arith.subf %62, %65 : vector<16x16xf32>
    %67 = math.exp %66 : vector<16x16xf32>
    %cst_40 = arith.constant dense<0.000000e+00> : vector<16xf32>
    %68 = vector.multi_reduction <add>, %67, %cst_40 [1] : vector<16x16xf32> to vector<16xf32>
    %69 = vector.shape_cast %68 : vector<16xf32> to vector<16x1xf32>
    %70 = tpu.reciprocal %69 {approx = true} : vector<16x1xf32> -> vector<16x1xf32>
    %71 = vector.broadcast %70 : vector<16x1xf32> to vector<16x16xf32>
    %72 = arith.mulf %67, %71 : vector<16x16xf32>
    %73 = arith.truncf %72 : vector<16x16xf32> to vector<16x16xbf16>
    %c0_41 = arith.constant 0 : index
    %c1_42 = arith.constant 1 : index
    %c0_43 = arith.constant 0 : index
    %c0_44 = arith.constant 0 : index
    %74 = vector.load %arg13[%c0_41, %c1_42, %c0_43, %c0_44] : memref<1x4x16x16xbf16, #tpu.memory_space<vmem>>, vector<1x1x16x16xbf16>
    %75 = vector.shape_cast %74 : vector<1x1x16x16xbf16> to vector<16x16xbf16>
    %76 = vector.shape_cast %73 : vector<16x16xbf16> to vector<1x1x16x16xbf16>
    tpu.vector_store %arg13[%c0_41, %c1_42, %c0_43, %c0_44], %76 {strides = array<i32>} : memref<1x4x16x16xbf16, #tpu.memory_space<vmem>>, vector<1x1x16x16xbf16>,
    %77 = arith.truncf %72 : vector<16x16xf32> to vector<16x16xbf16>
    %cst_45 = arith.constant dense<0.000000e+00> : vector<16x8xf32>
    %78 = tpu.matmul %77, %60, %cst_45 {dimension_numbers = #tpu.dot_dimension_numbers<[1], [0], [0], [1], [0, 0, 1, 1], [], []>} : vector<16x16xbf16>, vector<16x8xbf16>, vector<16x8xf32> -> vector<16x8xf32>
    %79 = arith.truncf %78 : vector<16x8xf32> to vector<16x8xbf16>
    %c0_46 = arith.constant 0 : index
    %c8 = arith.constant 8 : index
    %80 = vector.load %arg14[%c0_46, %c8] : memref<16x32xbf16, #tpu.memory_space<vmem>>, vector<16x8xbf16>
    tpu.vector_store %arg14[%c0_46, %c8], %79 {strides = array<i32>} : memref<16x32xbf16, #tpu.memory_space<vmem>>, vector<16x8xbf16>,
    %81 = vector.extract_strided_slice %11 {offsets = [0, 16], sizes = [16, 8], strides = [1, 1]} : vector<16x32xf32> to vector<16x8xf32>
    %82 = arith.truncf %81 : vector<16x8xf32> to vector<16x8xbf16>
    %83 = vector.extract_strided_slice %17 {offsets = [0, 16], sizes = [16, 8], strides = [1, 1]} : vector<16x32xf32> to vector<16x8xf32>
    %84 = arith.truncf %83 : vector<16x8xf32> to vector<16x8xbf16>
    %85 = vector.extract_strided_slice %23 {offsets = [0, 16], sizes = [16, 8], strides = [1, 1]} : vector<16x32xf32> to vector<16x8xf32>
    %86 = arith.truncf %85 : vector<16x8xf32> to vector<16x8xbf16>
    %cst_47 = arith.constant dense<0.000000e+00> : vector<16x16xf32>
    %87 = tpu.matmul %82, %84, %cst_47 {dimension_numbers = #tpu.dot_dimension_numbers<[1], [1], [0], [0], [0, 0, 1, 0], [], []>} : vector<16x8xbf16>, vector<16x8xbf16>, vector<16x16xf32> -> vector<16x16xf32>
    %88 = arith.addf %87, %28 : vector<16x16xf32>
    %cst_48 = arith.constant dense<0xFF800000> : vector<16xf32>
    %89 = vector.multi_reduction <maximumf>, %88, %cst_48 [1] : vector<16x16xf32> to vector<16xf32>
    %90 = vector.shape_cast %89 : vector<16xf32> to vector<16x1xf32>
    %91 = vector.broadcast %90 : vector<16x1xf32> to vector<16x16xf32>
    %92 = arith.subf %88, %91 : vector<16x16xf32>
    %93 = math.exp %92 : vector<16x16xf32>
    %cst_49 = arith.constant dense<0.000000e+00> : vector<16xf32>
    %94 = vector.multi_reduction <add>, %93, %cst_49 [1] : vector<16x16xf32> to vector<16xf32>
    %95 = vector.shape_cast %94 : vector<16xf32> to vector<16x1xf32>
    %96 = tpu.reciprocal %95 {approx = true} : vector<16x1xf32> -> vector<16x1xf32>
    %97 = vector.broadcast %96 : vector<16x1xf32> to vector<16x16xf32>
    %98 = arith.mulf %93, %97 : vector<16x16xf32>
    %99 = arith.truncf %98 : vector<16x16xf32> to vector<16x16xbf16>
    %c0_50 = arith.constant 0 : index
    %c2_51 = arith.constant 2 : index
    %c0_52 = arith.constant 0 : index
    %c0_53 = arith.constant 0 : index
    %100 = vector.load %arg13[%c0_50, %c2_51, %c0_52, %c0_53] : memref<1x4x16x16xbf16, #tpu.memory_space<vmem>>, vector<1x1x16x16xbf16>
    %101 = vector.shape_cast %100 : vector<1x1x16x16xbf16> to vector<16x16xbf16>
    %102 = vector.shape_cast %99 : vector<16x16xbf16> to vector<1x1x16x16xbf16>
    tpu.vector_store %arg13[%c0_50, %c2_51, %c0_52, %c0_53], %102 {strides = array<i32>} : memref<1x4x16x16xbf16, #tpu.memory_space<vmem>>, vector<1x1x16x16xbf16>,
    %103 = arith.truncf %98 : vector<16x16xf32> to vector<16x16xbf16>
    %cst_54 = arith.constant dense<0.000000e+00> : vector<16x8xf32>
    %104 = tpu.matmul %103, %86, %cst_54 {dimension_numbers = #tpu.dot_dimension_numbers<[1], [0], [0], [1], [0, 0, 1, 1], [], []>} : vector<16x16xbf16>, vector<16x8xbf16>, vector<16x8xf32> -> vector<16x8xf32>
    %105 = arith.truncf %104 : vector<16x8xf32> to vector<16x8xbf16>
    %c0_55 = arith.constant 0 : index
    %c16 = arith.constant 16 : index
    %106 = vector.load %arg14[%c0_55, %c16] : memref<16x32xbf16, #tpu.memory_space<vmem>>, vector<16x8xbf16>
    tpu.vector_store %arg14[%c0_55, %c16], %105 {strides = array<i32>} : memref<16x32xbf16, #tpu.memory_space<vmem>>, vector<16x8xbf16>,
    %107 = vector.extract_strided_slice %11 {offsets = [0, 24], sizes = [16, 8], strides = [1, 1]} : vector<16x32xf32> to vector<16x8xf32>
    %108 = arith.truncf %107 : vector<16x8xf32> to vector<16x8xbf16>
    %109 = vector.extract_strided_slice %17 {offsets = [0, 24], sizes = [16, 8], strides = [1, 1]} : vector<16x32xf32> to vector<16x8xf32>
    %110 = arith.truncf %109 : vector<16x8xf32> to vector<16x8xbf16>
    %111 = vector.extract_strided_slice %23 {offsets = [0, 24], sizes = [16, 8], strides = [1, 1]} : vector<16x32xf32> to vector<16x8xf32>
    %112 = arith.truncf %111 : vector<16x8xf32> to vector<16x8xbf16>
    %cst_56 = arith.constant dense<0.000000e+00> : vector<16x16xf32>
    %113 = tpu.matmul %108, %110, %cst_56 {dimension_numbers = #tpu.dot_dimension_numbers<[1], [1], [0], [0], [0, 0, 1, 0], [], []>} : vector<16x8xbf16>, vector<16x8xbf16>, vector<16x16xf32> -> vector<16x16xf32>
    %114 = arith.addf %113, %28 : vector<16x16xf32>
    %cst_57 = arith.constant dense<0xFF800000> : vector<16xf32>
    %115 = vector.multi_reduction <maximumf>, %114, %cst_57 [1] : vector<16x16xf32> to vector<16xf32>
    %116 = vector.shape_cast %115 : vector<16xf32> to vector<16x1xf32>
    %117 = vector.broadcast %116 : vector<16x1xf32> to vector<16x16xf32>
    %118 = arith.subf %114, %117 : vector<16x16xf32>
    %119 = math.exp %118 : vector<16x16xf32>
    %cst_58 = arith.constant dense<0.000000e+00> : vector<16xf32>
    %120 = vector.multi_reduction <add>, %119, %cst_58 [1] : vector<16x16xf32> to vector<16xf32>
    %121 = vector.shape_cast %120 : vector<16xf32> to vector<16x1xf32>
    %122 = tpu.reciprocal %121 {approx = true} : vector<16x1xf32> -> vector<16x1xf32>
    %123 = vector.broadcast %122 : vector<16x1xf32> to vector<16x16xf32>
    %124 = arith.mulf %119, %123 : vector<16x16xf32>
    %125 = arith.truncf %124 : vector<16x16xf32> to vector<16x16xbf16>
    %c0_59 = arith.constant 0 : index
    %c3 = arith.constant 3 : index
    %c0_60 = arith.constant 0 : index
    %c0_61 = arith.constant 0 : index
    %126 = vector.load %arg13[%c0_59, %c3, %c0_60, %c0_61] : memref<1x4x16x16xbf16, #tpu.memory_space<vmem>>, vector<1x1x16x16xbf16>
    %127 = vector.shape_cast %126 : vector<1x1x16x16xbf16> to vector<16x16xbf16>
    %128 = vector.shape_cast %125 : vector<16x16xbf16> to vector<1x1x16x16xbf16>
    tpu.vector_store %arg13[%c0_59, %c3, %c0_60, %c0_61], %128 {strides = array<i32>} : memref<1x4x16x16xbf16, #tpu.memory_space<vmem>>, vector<1x1x16x16xbf16>,
    %129 = arith.truncf %124 : vector<16x16xf32> to vector<16x16xbf16>
    %cst_62 = arith.constant dense<0.000000e+00> : vector<16x8xf32>
    %130 = tpu.matmul %129, %112, %cst_62 {dimension_numbers = #tpu.dot_dimension_numbers<[1], [0], [0], [1], [0, 0, 1, 1], [], []>} : vector<16x16xbf16>, vector<16x8xbf16>, vector<16x8xf32> -> vector<16x8xf32>
    %131 = arith.truncf %130 : vector<16x8xf32> to vector<16x8xbf16>
    %c0_63 = arith.constant 0 : index
    %c24 = arith.constant 24 : index
    %132 = vector.load %arg14[%c0_63, %c24] : memref<16x32xbf16, #tpu.memory_space<vmem>>, vector<16x8xbf16>
    tpu.vector_store %arg14[%c0_63, %c24], %131 {strides = array<i32>} : memref<16x32xbf16, #tpu.memory_space<vmem>>, vector<16x8xbf16>,
    %c0_64 = arith.constant 0 : index
    %c0_65 = arith.constant 0 : index
    %133 = vector.load %arg14[%c0_64, %c0_65] : memref<16x32xbf16, #tpu.memory_space<vmem>>, vector<16x32xbf16>
    %c0_66 = arith.constant 0 : index
    %c0_67 = arith.constant 0 : index
    %134 = vector.load %arg8[%c0_66, %c0_67] : memref<32x32xbf16, #tpu.memory_space<vmem>>, vector<32x32xbf16>
    %cst_68 = arith.constant dense<0.000000e+00> : vector<16x32xf32>
    %135 = tpu.matmul %133, %134, %cst_68 {dimension_numbers = #tpu.dot_dimension_numbers<[1], [0], [0], [1], [0, 0, 1, 1], [], []>} : vector<16x32xbf16>, vector<32x32xbf16>, vector<16x32xf32> -> vector<16x32xf32>
    %c0_69 = arith.constant 0 : index
    %c0_70 = arith.constant 0 : index
    %136 = vector.load %arg9[%c0_69, %c0_70] : memref<1x32xf32, #tpu.memory_space<vmem>>, vector<1x32xf32>
    %137 = vector.broadcast %136 : vector<1x32xf32> to vector<16x32xf32>
    %138 = arith.addf %135, %137 : vector<16x32xf32>
    %c0_71 = arith.constant 0 : index
    %c0_72 = arith.constant 0 : index
    %c0_73 = arith.constant 0 : index
    %139 = vector.load %arg12[%c0_71, %c0_72, %c0_73] : memref<1x16x32xf32, #tpu.memory_space<vmem>>, vector<1x16x32xf32>
    %140 = vector.shape_cast %139 : vector<1x16x32xf32> to vector<16x32xf32>
    %141 = vector.shape_cast %138 : vector<16x32xf32> to vector<1x16x32xf32>
    tpu.vector_store %arg12[%c0_71, %c0_72, %c0_73], %141 {strides = array<i32>} : memref<1x16x32xf32, #tpu.memory_space<vmem>>, vector<1x16x32xf32>,
    return
  }
  func.func @transform_0(%arg0: i32) -> (i32, i32, i32) {
    %c0_i32 = arith.constant 0 : i32
    %c0_i32_0 = arith.constant 0 : i32
    %c0_i32_1 = arith.constant 0 : i32
    return %arg0, %c0_i32, %c0_i32_0 : i32, i32, i32
  }
  func.func @transform_1(%arg0: i32) -> (i32, i32, i32) {
    %c0_i32 = arith.constant 0 : i32
    %c0_i32_0 = arith.constant 0 : i32
    %c0_i32_1 = arith.constant 0 : i32
    return %arg0, %c0_i32, %c0_i32_0 : i32, i32, i32
  }
  func.func @transform_2(%arg0: i32) -> (i32, i32, i32) {
    %c0_i32 = arith.constant 0 : i32
    %c0_i32_0 = arith.constant 0 : i32
    %c0_i32_1 = arith.constant 0 : i32
    return %arg0, %c0_i32, %c0_i32_0 : i32, i32, i32
  }
  func.func @transform_3(%arg0: i32) -> (i32, i32) {
    %c0_i32 = arith.constant 0 : i32
    %c0_i32_0 = arith.constant 0 : i32
    %c0_i32_1 = arith.constant 0 : i32
    return %c0_i32, %c0_i32_0 : i32, i32
  }
  func.func @transform_4(%arg0: i32) -> (i32, i32) {
    %c0_i32 = arith.constant 0 : i32
    %c0_i32_0 = arith.constant 0 : i32
    %c0_i32_1 = arith.constant 0 : i32
    return %c0_i32, %c0_i32_0 : i32, i32
  }
  func.func @transform_5(%arg0: i32) -> (i32, i32) {
    %c0_i32 = arith.constant 0 : i32
    %c0_i32_0 = arith.constant 0 : i32
    %c0_i32_1 = arith.constant 0 : i32
    return %c0_i32, %c0_i32_0 : i32, i32
  }
  func.func @transform_6(%arg0: i32) -> (i32, i32, i32) {
    %c0_i32 = arith.constant 0 : i32
    %c0_i32_0 = arith.constant 0 : i32
    %c0_i32_1 = arith.constant 0 : i32
    %c0_i32_2 = arith.constant 0 : i32
    return %c0_i32, %c0_i32_0, %c0_i32_1 : i32, i32, i32
  }
  func.func @transform_7(%arg0: i32) -> (i32, i32) {
    %c0_i32 = arith.constant 0 : i32
    %c0_i32_0 = arith.constant 0 : i32
    %c0_i32_1 = arith.constant 0 : i32
    return %c0_i32, %c0_i32_0 : i32, i32
  }
  func.func @transform_8(%arg0: i32) -> (i32, i32) {
    %c0_i32 = arith.constant 0 : i32
    %c0_i32_0 = arith.constant 0 : i32
    %c0_i32_1 = arith.constant 0 : i32
    return %c0_i32, %c0_i32_0 : i32, i32
  }
  func.func @transform_9(%arg0: i32) -> (i32, i32) {
    %c0_i32 = arith.constant 0 : i32
    %c0_i32_0 = arith.constant 0 : i32
    %c0_i32_1 = arith.constant 0 : i32
    return %c0_i32, %c0_i32_0 : i32, i32
  }
  func.func @transform_10(%arg0: i32) -> (i32, i32, i32) {
    %c0_i32 = arith.constant 0 : i32
    %c0_i32_0 = arith.constant 0 : i32
    %c0_i32_1 = arith.constant 0 : i32
    return %arg0, %c0_i32, %c0_i32_0 : i32, i32, i32
  }
  func.func @transform_11(%arg0: i32) -> (i32, i32, i32) {
    %c0_i32 = arith.constant 0 : i32
    %c0_i32_0 = arith.constant 0 : i32
    %c0_i32_1 = arith.constant 0 : i32
    return %arg0, %c0_i32, %c0_i32_0 : i32, i32, i32
  }
  func.func @transform_12(%arg0: i32) -> (i32, i32, i32, i32) {
    %c0_i32 = arith.constant 0 : i32
    %c0_i32_0 = arith.constant 0 : i32
    %c0_i32_1 = arith.constant 0 : i32
    %c0_i32_2 = arith.constant 0 : i32
    return %arg0, %c0_i32, %c0_i32_0, %c0_i32_1 : i32, i32, i32, i32
  }
}

</mosaic_0001>

<llo_original>
// kernel: tpu_custom_call.1
$region0: #{tpu_custom_call.1}
  #allocation0 [shape = 'u32[]', space=smem, size = 0x4, offset = 0x4, fixed_abs, tag = 'smem constant byte address 0x4 - core index']
  #allocation1 [shape = 'u32[144,128]{1,0:T(1,128)}', space=vmem, size = 0x12000, scoped, tag = 'internal scratch']
  #allocation2 [shape = 'bf16[16,32]{1,0:T(8,128)(2,1)}', space=vmem, size = 0x1000, scoped, tag = 'scratch operand']
  %s0 = inlined_call_operand.hbm [shape: bf16[2,16,32], index: 0, kind: input, shape index: {}]
  %s1 = inlined_call_operand.hbm [shape: bf16[2,16,32], index: 1, kind: input, shape index: {}]
  %s2 = inlined_call_operand.hbm [shape: bf16[2,16,32], index: 2, kind: input, shape index: {}]
  %s3 = inlined_call_operand.hbm [shape: bf16[32,32], index: 3, kind: input, shape index: {}]
  %s4 = inlined_call_operand.hbm [shape: bf16[32,32], index: 4, kind: input, shape index: {}]
  %s5 = inlined_call_operand.hbm [shape: bf16[32,32], index: 5, kind: input, shape index: {}]
  %s6 = inlined_call_operand.hbm [shape: f32[3,1,32], index: 6, kind: input, shape index: {}]
  %s7 = inlined_call_operand.hbm [shape: bf16[32,32], index: 7, kind: input, shape index: {}]
  %s8 = inlined_call_operand.hbm [shape: f32[1,32], index: 8, kind: input, shape index: {}]
  %s9 = inlined_call_operand.vmem [shape: f32[16,16], index: 9, kind: input, shape index: {}]
  %s10 = inlined_call_operand.vmem [shape: f32[2,1,16], index: 10, kind: input, shape index: {}]
  %s11 = inlined_call_operand.hbm [shape: f32[2,16,32], index: 11, kind: output, shape index: {0}]
  %s12 = inlined_call_operand.hbm [shape: bf16[2,4,16,16], index: 12, kind: output, shape index: {1}]
  %13 = xla_tuple %s11, %s12
  %s14 = sld [smem:[#allocation0]]
  $region121: #{tpu_custom_call.1} parent=0
    _
  %s16 = ssub.s32 1, %s14
  %s17 = scalar_select 0, %s16, %s14
  $region1: #{tpu_custom_call.1} parent=0
    #allocation3 [shape = 'u8[8192]{0}', space=vmem, size = 0x2000, scoped, tag = 'input window, operand 0']
    #allocation4 [shape = 's32[2]{0}', space=sflag, size = 0x8, scoped, tag = 'scoped memory for tpu_custom_call.1']
    #allocation5 [shape = 's32[2]{0}', space=sflag, size = 0x8, scoped, tag = 'scoped memory for tpu_custom_call.1']
    #allocation6 [shape = 'u8[8192]{0}', space=vmem, size = 0x2000, scoped, tag = 'input window, operand 1']
    #allocation7 [shape = 's32[2]{0}', space=sflag, size = 0x8, scoped, tag = 'scoped memory for tpu_custom_call.1']
    #allocation8 [shape = 'u8[8192]{0}', space=vmem, size = 0x2000, scoped, tag = 'input window, operand 2']
    #allocation9 [shape = 'u8[8192]{0}', space=vmem, size = 0x2000, scoped, tag = 'input window, operand 3, single buffered']
    #allocation10 [shape = 's32[1]{0}', space=sflag, size = 0x4, scoped, tag = 'scoped memory for tpu_custom_call.1']
    #allocation11 [shape = 'u8[8192]{0}', space=vmem, size = 0x2000, scoped, tag = 'input window, operand 4, single buffered']
    #allocation12 [shape = 'u8[8192]{0}', space=vmem, size = 0x2000, scoped, tag = 'input window, operand 5, single buffered']
    #allocation13 [shape = 's32[1]{0}', space=sflag, size = 0x4, scoped, tag = 'scoped memory for tpu_custom_call.1']
    #allocation14 [shape = 'u8[1536]{0}', space=vmem, size = 0x800, scoped, tag = 'input window, operand 6, single buffered']
    #allocation15 [shape = 'u8[8192]{0}', space=vmem, size = 0x2000, scoped, tag = 'input window, operand 7, single buffered']
    #allocation16 [shape = 's32[1]{0}', space=sflag, size = 0x4, scoped, tag = 'scoped memory for tpu_custom_call.1']
    #allocation17 [shape = 'u8[512]{0}', space=vmem, size = 0x400, scoped, tag = 'input window, operand 8, single buffered']
    #allocation18 [shape = 'u8[16384]{0}', space=vmem, size = 0x4000, scoped, tag = 'output window, operand 0']
    #allocation19 [shape = 'u8[32768]{0}', space=vmem, size = 0x8000, scoped, tag = 'output window, operand 1']
    #allocation20 [shape = 's32[2]{0}', space=sflag, size = 0x8, scoped, tag = 'scoped memory for tpu_custom_call.1']
    %18 = vsyncpa [#allocation4], 0
    %s19 = scalar_lea.sflag [#allocation4], 1
    %20 = vsyncpa %s19, 0
    %21 = vsyncpa [#allocation7], 0
    %s22 = scalar_lea.sflag [#allocation7], 1
    %23 = vsyncpa %s22, 0
    %24 = vsyncpa [#allocation10], 0
    %25 = vsyncpa [#allocation13], 0
    %26 = vsyncpa [#allocation16], 0
    %27 = vsyncpa [#allocation5], 0
    %s28 = scalar_lea.sflag [#allocation5], 1
    %29 = vsyncpa %s28, 0
    %30 = vsyncpa [#allocation20], 0
    %s31 = scalar_lea.sflag [#allocation20], 1
    %32 = vsyncpa %s31, 0
    loop: start=0, step=1, limit=4
    $region2: #{tpu_custom_call.1} parent=1 // loop_pre_header
      _
    $region3: #{tpu_custom_call.1} parent=1 // loop_header
      %s34 = sphi 0, %s38
      %p35 = scmp.ge.s32.totalorder %s34, 4
      %s44 = sphi 0, %s46
      %s47 = sphi 0, %s44
      %s48 = sphi 0, %s47
      %s64 = sphi 0, %s48
      %s70 = sphi 0, %s72
      %s73 = sphi 0, %s70
      %s74 = sphi 0, %s73
      %s90 = sphi 0, %s74
      %s96 = sphi 0, %s98
      %s99 = sphi 0, %s96
      %s100 = sphi 0, %s99
      %s116 = sphi 0, %s100
      %s120 = sphi 0, %s120
      %s122 = sphi 0, %s120
      %s123 = sphi 0, %s122
      %s137 = sphi 0, %s123
      %s141 = sphi 0, %s141
      %s143 = sphi 0, %s141
      %s144 = sphi 0, %s143
      %s158 = sphi 0, %s144
      %s162 = sphi 0, %s162
      %s164 = sphi 0, %s162
      %s165 = sphi 0, %s164
      %s179 = sphi 0, %s165
      %s183 = sphi 0, %s183
      %s185 = sphi 0, %s183
      %s186 = sphi 0, %s185
      %s200 = sphi 0, %s186
      %s204 = sphi 0, %s204
      %s206 = sphi 0, %s204
      %s207 = sphi 0, %s206
      %s221 = sphi 0, %s207
      %s225 = sphi 0, %s225
      %s227 = sphi 0, %s225
      %s228 = sphi 0, %s227
      %s242 = sphi 0, %s228
      %s246 = sphi 0, %s246
      %s248 = sphi 0, %s246
      %s249 = sphi 0, %s248
      %s263 = sphi 0, %s249
      %s269 = sphi 0, %s271
      %s272 = sphi 0, %s269
      %s273 = sphi 0, %s272
      %s289 = sphi 0, %s273
      %s295 = sphi 0, %s297
      %s298 = sphi 0, %s295
      %s299 = sphi 0, %s298
      %s315 = sphi 0, %s299
      %s321 = sphi 0, %s323
      %s324 = sphi 0, %s321
      %s325 = sphi 0, %s324
      %s341 = sphi 0, %s325
    $region4: #{tpu_custom_call.1} parent=1 // loop_header_branch
      %37 = sbr.rel (%p35) target = $region8
    $region5: #{tpu_custom_call.1} parent=1 // loop_body
      %s39 = ssub.s32 %s34, 1
      %s40 = ssub.s32 %s34, 2
      %s41 = sadd.s32 %s34, 1
      %s42 = ssub.s32 %s34, %s41
      %p43 = scmp.eq.s32.totalorder %s42, 0
      %s45 = sadd.s32 %s44, 1
      %s46 = scalar_select %p43, %s44, %s45
      %p49 = pneg %p43
      %p50 = scmp.eq.s32.totalorder %s34, 1
      %p51 = por %p49, %p50
      %p52 = scmp.ne.s32.totalorder %s44, %s47
      %p53 = scmp.eq.s32.totalorder %s34, 0
      %p54 = por %p52, %p53
      %p55 = scmp.ne.s32.totalorder %s44, %s47
      %p56 = scmp.eq.s32.totalorder %s39, 1
      %p57 = por %p55, %p56
      %p58 = scmp.ne.s32.totalorder %s47, %s48
      %p59 = scmp.eq.s32.totalorder %s39, 0
      %p60 = por %p58, %p59
      %p61 = scmp.ne.s32.totalorder %s47, %s48
      %p62 = scmp.eq.s32.totalorder %s40, 1
      %p63 = por %p61, %p62
      %p65 = scmp.ne.s32.totalorder %s48, %s64
      %p66 = scmp.eq.s32.totalorder %s40, 0
      %p67 = por %p65, %p66
      %s68 = ssub.s32 %s34, %s41
      %p69 = scmp.eq.s32.totalorder %s68, 0
      %s71 = sadd.s32 %s70, 1
      %s72 = scalar_select %p69, %s70, %s71
      %p75 = pneg %p69
      %p76 = scmp.eq.s32.totalorder %s34, 1
      %p77 = por %p75, %p76
      %p78 = scmp.ne.s32.totalorder %s70, %s73
      %p79 = scmp.eq.s32.totalorder %s34, 0
      %p80 = por %p78, %p79
      %p81 = scmp.ne.s32.totalorder %s70, %s73
      %p82 = scmp.eq.s32.totalorder %s39, 1
      %p83 = por %p81, %p82
      %p84 = scmp.ne.s32.totalorder %s73, %s74
      %p85 = scmp.eq.s32.totalorder %s39, 0
      %p86 = por %p84, %p85
      %p87 = scmp.ne.s32.totalorder %s73, %s74
      %p88 = scmp.eq.s32.totalorder %s40, 1
      %p89 = por %p87, %p88
      %p91 = scmp.ne.s32.totalorder %s74, %s90
      %p92 = scmp.eq.s32.totalorder %s40, 0
      %p93 = por %p91, %p92
      %s94 = ssub.s32 %s34, %s41
      %p95 = scmp.eq.s32.totalorder %s94, 0
      %s97 = sadd.s32 %s96, 1
      %s98 = scalar_select %p95, %s96, %s97
      %p101 = pneg %p95
      %p102 = scmp.eq.s32.totalorder %s34, 1
      %p103 = por %p101, %p102
      %p104 = scmp.ne.s32.totalorder %s96, %s99
      %p105 = scmp.eq.s32.totalorder %s34, 0
      %p106 = por %p104, %p105
      %p107 = scmp.ne.s32.totalorder %s96, %s99
      %p108 = scmp.eq.s32.totalorder %s39, 1
      %p109 = por %p107, %p108
      %p110 = scmp.ne.s32.totalorder %s99, %s100
      %p111 = scmp.eq.s32.totalorder %s39, 0
      %p112 = por %p110, %p111
      %p113 = scmp.ne.s32.totalorder %s99, %s100
      %p114 = scmp.eq.s32.totalorder %s40, 1
      %p115 = por %p113, %p114
      %p117 = scmp.ne.s32.totalorder %s100, %s116
      %p118 = scmp.eq.s32.totalorder %s40, 0
      %p119 = por %p117, %p118
      %s121 = sadd.s32 %s120, 1
      %p124 = scmp.eq.s32.totalorder %s34, 1
      %p125 = scmp.ne.s32.totalorder %s120, %s122
      %p126 = scmp.eq.s32.totalorder %s34, 0
      %p127 = por %p125, %p126
      %p128 = scmp.ne.s32.totalorder %s120, %s122
      %p129 = scmp.eq.s32.totalorder %s39, 1
      %p130 = por %p128, %p129
      %p131 = scmp.ne.s32.totalorder %s122, %s123
      %p132 = scmp.eq.s32.totalorder %s39, 0
      %p133 = por %p131, %p132
      %p134 = scmp.ne.s32.totalorder %s122, %s123
      %p135 = scmp.eq.s32.totalorder %s40, 1
      %p136 = por %p134, %p135
      %p138 = scmp.ne.s32.totalorder %s123, %s137
      %p139 = scmp.eq.s32.totalorder %s40, 0
      %p140 = por %p138, %p139
      %s142 = sadd.s32 %s141, 1
      %p145 = scmp.eq.s32.totalorder %s34, 1
      %p146 = scmp.ne.s32.totalorder %s141, %s143
      %p147 = scmp.eq.s32.totalorder %s34, 0
      %p148 = por %p146, %p147
      %p149 = scmp.ne.s32.totalorder %s141, %s143
      %p150 = scmp.eq.s32.totalorder %s39, 1
      %p151 = por %p149, %p150
      %p152 = scmp.ne.s32.totalorder %s143, %s144
      %p153 = scmp.eq.s32.totalorder %s39, 0
      %p154 = por %p152, %p153
      %p155 = scmp.ne.s32.totalorder %s143, %s144
      %p156 = scmp.eq.s32.totalorder %s40, 1
      %p157 = por %p155, %p156
      %p159 = scmp.ne.s32.totalorder %s144, %s158
      %p160 = scmp.eq.s32.totalorder %s40, 0
      %p161 = por %p159, %p160
      %s163 = sadd.s32 %s162, 1
      %p166 = scmp.eq.s32.totalorder %s34, 1
      %p167 = scmp.ne.s32.totalorder %s162, %s164
      %p168 = scmp.eq.s32.totalorder %s34, 0
      %p169 = por %p167, %p168
      %p170 = scmp.ne.s32.totalorder %s162, %s164
      %p171 = scmp.eq.s32.totalorder %s39, 1
      %p172 = por %p170, %p171
      %p173 = scmp.ne.s32.totalorder %s164, %s165
      %p174 = scmp.eq.s32.totalorder %s39, 0
      %p175 = por %p173, %p174
      %p176 = scmp.ne.s32.totalorder %s164, %s165
      %p177 = scmp.eq.s32.totalorder %s40, 1
      %p178 = por %p176, %p177
      %p180 = scmp.ne.s32.totalorder %s165, %s179
      %p181 = scmp.eq.s32.totalorder %s40, 0
      %p182 = por %p180, %p181
      %s184 = sadd.s32 %s183, 1
      %p187 = scmp.eq.s32.totalorder %s34, 1
      %p188 = scmp.ne.s32.totalorder %s183, %s185
      %p189 = scmp.eq.s32.totalorder %s34, 0
      %p190 = por %p188, %p189
      %p191 = scmp.ne.s32.totalorder %s183, %s185
      %p192 = scmp.eq.s32.totalorder %s39, 1
      %p193 = por %p191, %p192
      %p194 = scmp.ne.s32.totalorder %s185, %s186
      %p195 = scmp.eq.s32.totalorder %s39, 0
      %p196 = por %p194, %p195
      %p197 = scmp.ne.s32.totalorder %s185, %s186
      %p198 = scmp.eq.s32.totalorder %s40, 1
      %p199 = por %p197, %p198
      %p201 = scmp.ne.s32.totalorder %s186, %s200
      %p202 = scmp.eq.s32.totalorder %s40, 0
      %p203 = por %p201, %p202
      %s205 = sadd.s32 %s204, 1
      %p208 = scmp.eq.s32.totalorder %s34, 1
      %p209 = scmp.ne.s32.totalorder %s204, %s206
      %p210 = scmp.eq.s32.totalorder %s34, 0
      %p211 = por %p209, %p210
      %p212 = scmp.ne.s32.totalorder %s204, %s206
      %p213 = scmp.eq.s32.totalorder %s39, 1
      %p214 = por %p212, %p213
      %p215 = scmp.ne.s32.totalorder %s206, %s207
      %p216 = scmp.eq.s32.totalorder %s39, 0
      %p217 = por %p215, %p216
      %p218 = scmp.ne.s32.totalorder %s206, %s207
      %p219 = scmp.eq.s32.totalorder %s40, 1
      %p220 = por %p218, %p219
      %p222 = scmp.ne.s32.totalorder %s207, %s221
      %p223 = scmp.eq.s32.totalorder %s40, 0
      %p224 = por %p222, %p223
      %s226 = sadd.s32 %s225, 1
      %p229 = scmp.eq.s32.totalorder %s34, 1
      %p230 = scmp.ne.s32.totalorder %s225, %s227
      %p231 = scmp.eq.s32.totalorder %s34, 0
      %p232 = por %p230, %p231
      %p233 = scmp.ne.s32.totalorder %s225, %s227
      %p234 = scmp.eq.s32.totalorder %s39, 1
      %p235 = por %p233, %p234
      %p236 = scmp.ne.s32.totalorder %s227, %s228
      %p237 = scmp.eq.s32.totalorder %s39, 0
      %p238 = por %p236, %p237
      %p239 = scmp.ne.s32.totalorder %s227, %s228
      %p240 = scmp.eq.s32.totalorder %s40, 1
      %p241 = por %p239, %p240
      %p243 = scmp.ne.s32.totalorder %s228, %s242
      %p244 = scmp.eq.s32.totalorder %s40, 0
      %p245 = por %p243, %p244
      %s247 = sadd.s32 %s246, 1
      %p250 = scmp.eq.s32.totalorder %s34, 1
      %p251 = scmp.ne.s32.totalorder %s246, %s248
      %p252 = scmp.eq.s32.totalorder %s34, 0
      %p253 = por %p251, %p252
      %p254 = scmp.ne.s32.totalorder %s246, %s248
      %p255 = scmp.eq.s32.totalorder %s39, 1
      %p256 = por %p254, %p255
      %p257 = scmp.ne.s32.totalorder %s248, %s249
      %p258 = scmp.eq.s32.totalorder %s39, 0
      %p259 = por %p257, %p258
      %p260 = scmp.ne.s32.totalorder %s248, %s249
      %p261 = scmp.eq.s32.totalorder %s40, 1
      %p262 = por %p260, %p261
      %p264 = scmp.ne.s32.totalorder %s249, %s263
      %p265 = scmp.eq.s32.totalorder %s40, 0
      %p266 = por %p264, %p265
      %s267 = ssub.s32 %s34, %s41
      %p268 = scmp.eq.s32.totalorder %s267, 0
      %s270 = sadd.s32 %s269, 1
      %s271 = scalar_select %p268, %s269, %s270
      %p274 = pneg %p268
      %p275 = scmp.eq.s32.totalorder %s34, 1
      %p276 = por %p274, %p275
      %p277 = scmp.ne.s32.totalorder %s269, %s272
      %p278 = scmp.eq.s32.totalorder %s34, 0
      %p279 = por %p277, %p278
      %p280 = scmp.ne.s32.totalorder %s269, %s272
      %p281 = scmp.eq.s32.totalorder %s39, 1
      %p282 = por %p280, %p281
      %p283 = scmp.ne.s32.totalorder %s272, %s273
      %p284 = scmp.eq.s32.totalorder %s39, 0
      %p285 = por %p283, %p284
      %p286 = scmp.ne.s32.totalorder %s272, %s273
      %p287 = scmp.eq.s32.totalorder %s40, 1
      %p288 = por %p286, %p287
      %p290 = scmp.ne.s32.totalorder %s273, %s289
      %p291 = scmp.eq.s32.totalorder %s40, 0
      %p292 = por %p290, %p291
      %s293 = ssub.s32 %s34, %s41
      %p294 = scmp.eq.s32.totalorder %s293, 0
      %s296 = sadd.s32 %s295, 1
      %s297 = scalar_select %p294, %s295, %s296
      %p300 = pneg %p294
      %p301 = scmp.eq.s32.totalorder %s34, 1
      %p302 = por %p300, %p301
      %p303 = scmp.ne.s32.totalorder %s295, %s298
      %p304 = scmp.eq.s32.totalorder %s34, 0
      %p305 = por %p303, %p304
      %p306 = scmp.ne.s32.totalorder %s295, %s298
      %p307 = scmp.eq.s32.totalorder %s39, 1
      %p308 = por %p306, %p307
      %p309 = scmp.ne.s32.totalorder %s298, %s299
      %p310 = scmp.eq.s32.totalorder %s39, 0
      %p311 = por %p309, %p310
      %p312 = scmp.ne.s32.totalorder %s298, %s299
      %p313 = scmp.eq.s32.totalorder %s40, 1
      %p314 = por %p312, %p313
      %p316 = scmp.ne.s32.totalorder %s299, %s315
      %p317 = scmp.eq.s32.totalorder %s40, 0
      %p318 = por %p316, %p317
      %s319 = ssub.s32 %s34, %s41
      %p320 = scmp.eq.s32.totalorder %s319, 0
      %s322 = sadd.s32 %s321, 1
      %s323 = scalar_select %p320, %s321, %s322
      %p326 = pneg %p320
      %p327 = scmp.eq.s32.totalorder %s34, 1
      %p328 = por %p326, %p327
      %p329 = scmp.ne.s32.totalorder %s321, %s324
      %p330 = scmp.eq.s32.totalorder %s34, 0
      %p331 = por %p329, %p330
      %p332 = scmp.ne.s32.totalorder %s321, %s324
      %p333 = scmp.eq.s32.totalorder %s39, 1
      %p334 = por %p332, %p333
      %p335 = scmp.ne.s32.totalorder %s324, %s325
      %p336 = scmp.eq.s32.totalorder %s39, 0
      %p337 = por %p335, %p336
      %p338 = scmp.ne.s32.totalorder %s324, %s325
      %p339 = scmp.eq.s32.totalorder %s40, 1
      %p340 = por %p338, %p339
      %p342 = scmp.ne.s32.totalorder %s325, %s341
      %p343 = scmp.eq.s32.totalorder %s40, 0
      %p344 = por %p342, %p343
      %p345 = scmp.le.s32.totalorder 1, %s34
      %p346 = scmp.lt.s32.totalorder %s34, 3
      %p347 = pnand %p345, %p346
      %p348 = pneg %p347
      // Predicated region
      $region9: #{tpu_custom_call.1} parent=5 // pred_check
        _
      $region10: #{tpu_custom_call.1} parent=5 // pred_check_branch
        %350 = sbr.rel (%p347) target = $region12
      $region11: #{tpu_custom_call.1} parent=5 // pred_region
        %s351 = ssub.s32 %s34, 1
        // Predicated region
        $region13: #{tpu_custom_call.1} parent=11 // pred_check
          %p352 = pneg %p133
        $region14: #{tpu_custom_call.1} parent=11 // pred_check_branch
          %354 = sbr.rel (%p352) target = $region16
        $region15: #{tpu_custom_call.1} parent=11 // pred_region
          %s356 = ssub.s32 256, 256
          %357 = vsyncadd [#allocation10], %s356
          %s358 = sshll.u32 [#allocation9], 4
          %s359 = int_to_ptr.vmem [resolvable:$true] %s358
          %364 = dma.hbm_to_vmem [thread:$0]  %s3, 256, %s359, [#allocation10], 64, 64, 4
        $region16: #{tpu_custom_call.1} parent=11 // pred_fallthru
          _
        // Predicated region
        $region17: #{tpu_custom_call.1} parent=11 // pred_check
          %p365 = pneg %p154
        $region18: #{tpu_custom_call.1} parent=11 // pred_check_branch
          %367 = sbr.rel (%p365) target = $region20
        $region19: #{tpu_custom_call.1} parent=11 // pred_region
          %s369 = ssub.s32 256, 256
          %370 = vsyncadd [#allocation10], %s369
          %s371 = sshll.u32 [#allocation11], 4
          %s372 = int_to_ptr.vmem [resolvable:$true] %s371
          %377 = dma.hbm_to_vmem [thread:$0]  %s4, 256, %s372, [#allocation10], 64, 64, 4
        $region20: #{tpu_custom_call.1} parent=11 // pred_fallthru
          _
        // Predicated region
        $region21: #{tpu_custom_call.1} parent=11 // pred_check
          %p378 = pneg %p175
        $region22: #{tpu_custom_call.1} parent=11 // pred_check_branch
          %380 = sbr.rel (%p378) target = $region24
        $region23: #{tpu_custom_call.1} parent=11 // pred_region
          %s382 = ssub.s32 256, 256
          %383 = vsyncadd [#allocation13], %s382
          %s384 = sshll.u32 [#allocation12], 4
          %s385 = int_to_ptr.vmem [resolvable:$true] %s384
          %390 = dma.hbm_to_vmem [thread:$0]  %s5, 256, %s385, [#allocation13], 64, 64, 4
        $region24: #{tpu_custom_call.1} parent=11 // pred_fallthru
          _
        // Predicated region
        $region25: #{tpu_custom_call.1} parent=11 // pred_check
          %p391 = pneg %p196
        $region26: #{tpu_custom_call.1} parent=11 // pred_check_branch
          %393 = sbr.rel (%p391) target = $region28
        $region27: #{tpu_custom_call.1} parent=11 // pred_region
          %s395 = ssub.s32 48, 48
          %396 = vsyncadd [#allocation13], %s395
          %s397 = sshll.u32 [#allocation14], 4
          %s398 = int_to_ptr.vmem [resolvable:$true] %s397
          %403 = dma.hbm_to_vmem [thread:$0]  %s6, 48, %s398, [#allocation13], 16, 16, 1
        $region28: #{tpu_custom_call.1} parent=11 // pred_fallthru
          _
        // Predicated region
        $region29: #{tpu_custom_call.1} parent=11 // pred_check
          %p404 = pneg %p217
        $region30: #{tpu_custom_call.1} parent=11 // pred_check_branch
          %406 = sbr.rel (%p404) target = $region32
        $region31: #{tpu_custom_call.1} parent=11 // pred_region
          %s408 = ssub.s32 256, 256
          %409 = vsyncadd [#allocation16], %s408
          %s410 = sshll.u32 [#allocation15], 4
          %s411 = int_to_ptr.vmem [resolvable:$true] %s410
          %416 = dma.hbm_to_vmem [thread:$0]  %s7, 256, %s411, [#allocation16], 64, 64, 4
        $region32: #{tpu_custom_call.1} parent=11 // pred_fallthru
          _
        // Predicated region
        $region33: #{tpu_custom_call.1} parent=11 // pred_check
          %p417 = pneg %p238
        $region34: #{tpu_custom_call.1} parent=11 // pred_check_branch
          %419 = sbr.rel (%p417) target = $region36
        $region35: #{tpu_custom_call.1} parent=11 // pred_region
          %s421 = ssub.s32 16, 16
          %422 = vsyncadd [#allocation16], %s421
          %s424 = sshll.u32 [#allocation17], 4
          %s425 = int_to_ptr.vmem [resolvable:$true] %s424
          %427 = dma.hbm_to_vmem [thread:$0]  %s8, 16, %s425, [#allocation16]
        $region36: #{tpu_custom_call.1} parent=11 // pred_fallthru
          _
        // Predicated region
        $region37: #{tpu_custom_call.1} parent=11 // pred_check
          %p428 = pneg %p259
        $region38: #{tpu_custom_call.1} parent=11 // pred_check_branch
          %430 = sbr.rel (%p428) target = $region40
        $region39: #{tpu_custom_call.1} parent=11 // pred_region
          _
        $region40: #{tpu_custom_call.1} parent=11 // pred_fallthru
          _
      $region12: #{tpu_custom_call.1} parent=5 // pred_fallthru
        _
      %p431 = scmp.lt.s32.totalorder %s34, 2
      // Predicated region
      $region41: #{tpu_custom_call.1} parent=5 // pred_check
        %p432 = pneg %p431
      $region42: #{tpu_custom_call.1} parent=5 // pred_check_branch
        %434 = sbr.rel (%p432) target = $region44
      $region43: #{tpu_custom_call.1} parent=5 // pred_region
        // Predicated region
        $region45: #{tpu_custom_call.1} parent=43 // pred_check
          %p435 = pneg %p54
        $region46: #{tpu_custom_call.1} parent=43 // pred_check_branch
          %437 = sbr.rel (%p435) target = $region48
        $region47: #{tpu_custom_call.1} parent=43 // pred_region
          %s438 = sand.u32 %s44, 1
          %s439 = scalar_lea.sflag [#allocation4], %s438
          %s440 = sand.u32 %s44, 1
          %s441 = smul.addr %s440, 8
          %s442 = scalar_lea.vmem [#allocation3], %s441
          %s444 = ssub.s32 128, 128
          %445 = vsyncadd %s439, %s444
          %s446 = smul.addr %s34, 2
          %s447 = smul.addr %s446, 64
          %s448 = scalar_lea.hbm %s0, %s447
          %s449 = sshll.u32 %s442, 4
          %s450 = int_to_ptr.vmem [resolvable:$true] %s449
          %455 = dma.hbm_to_vmem [thread:$0]  %s448, 128, %s450, %s439, 64, 64, 4
        $region48: #{tpu_custom_call.1} parent=43 // pred_fallthru
          _
        // Predicated region
        $region49: #{tpu_custom_call.1} parent=43 // pred_check
          %p456 = pneg %p80
        $region50: #{tpu_custom_call.1} parent=43 // pred_check_branch
          %458 = sbr.rel (%p456) target = $region52
        $region51: #{tpu_custom_call.1} parent=43 // pred_region
          %s459 = sand.u32 %s34, 1
          %s460 = scalar_lea.sflag [#allocation7], %s459
          %s461 = sand.u32 %s70, 1
          %s462 = smul.addr %s461, 8
          %s463 = scalar_lea.vmem [#allocation6], %s462
          %s465 = ssub.s32 128, 128
          %466 = vsyncadd %s460, %s465
          %s467 = smul.addr %s34, 2
          %s468 = smul.addr %s467, 64
          %s469 = scalar_lea.hbm %s1, %s468
          %s470 = sshll.u32 %s463, 4
          %s471 = int_to_ptr.vmem [resolvable:$true] %s470
          %476 = dma.hbm_to_vmem [thread:$0]  %s469, 128, %s471, %s460, 64, 64, 4
        $region52: #{tpu_custom_call.1} parent=43 // pred_fallthru
          _
        // Predicated region
        $region53: #{tpu_custom_call.1} parent=43 // pred_check
          %p477 = pneg %p106
        $region54: #{tpu_custom_call.1} parent=43 // pred_check_branch
          %479 = sbr.rel (%p477) target = $region56
        $region55: #{tpu_custom_call.1} parent=43 // pred_region
          %s480 = sand.u32 %s34, 1
          %s481 = scalar_lea.sflag [#allocation7], %s480
          %s482 = sand.u32 %s96, 1
          %s483 = smul.addr %s482, 8
          %s484 = scalar_lea.vmem [#allocation8], %s483
          %s486 = ssub.s32 128, 128
          %487 = vsyncadd %s481, %s486
          %s488 = smul.addr %s34, 2
          %s489 = smul.addr %s488, 64
          %s490 = scalar_lea.hbm %s2, %s489
          %s491 = sshll.u32 %s484, 4
          %s492 = int_to_ptr.vmem [resolvable:$true] %s491
          %497 = dma.hbm_to_vmem [thread:$0]  %s490, 128, %s492, %s481, 64, 64, 4
        $region56: #{tpu_custom_call.1} parent=43 // pred_fallthru
          _
        // Predicated region
        $region57: #{tpu_custom_call.1} parent=43 // pred_check
          %p498 = pneg %p279
        $region58: #{tpu_custom_call.1} parent=43 // pred_check_branch
          %500 = sbr.rel (%p498) target = $region60
        $region59: #{tpu_custom_call.1} parent=43 // pred_region
          %p501 = scmp.lt.s32.totalorder %s34, 1
          %s502 = scalar_select %p501, %s34, 1
          %s503 = scalar_lea.vmem %s10, %s502
        $region60: #{tpu_custom_call.1} parent=43 // pred_fallthru
          _
      $region44: #{tpu_custom_call.1} parent=5 // pred_fallthru
        _
      %p504 = scmp.le.s32.totalorder 1, %s34
      %p505 = scmp.lt.s32.totalorder %s34, 3
      %p506 = pnand %p504, %p505
      %p507 = pneg %p506
      // Predicated region
      $region61: #{tpu_custom_call.1} parent=5 // pred_check
        _
      $region62: #{tpu_custom_call.1} parent=5 // pred_check_branch
        %509 = sbr.rel (%p506) target = $region64
      $region63: #{tpu_custom_call.1} parent=5 // pred_region
        %s510 = ssub.s32 %s34, 1
        %s511 = sand.u32 %s47, 1
        %s512 = scalar_lea.sflag [#allocation4], %s511
        %s513 = sand.u32 %s47, 1
        %s514 = smul.addr %s513, 8
        %s515 = scalar_lea.vmem [#allocation3], %s514
        // Predicated region
        $region65: #{tpu_custom_call.1} parent=63 // pred_check
          %p516 = pneg %p60
        $region66: #{tpu_custom_call.1} parent=63 // pred_check_branch
          %518 = sbr.rel (%p516) target = $region68
        $region67: #{tpu_custom_call.1} parent=63 // pred_region
          %519 = dma.done %s512, 128
        $region68: #{tpu_custom_call.1} parent=63 // pred_fallthru
          _
        %s520 = sand.u32 %s39, 1
        %s521 = scalar_lea.sflag [#allocation7], %s520
        %s522 = sand.u32 %s73, 1
        %s523 = smul.addr %s522, 8
        %s524 = scalar_lea.vmem [#allocation6], %s523
        // Predicated region
        $region69: #{tpu_custom_call.1} parent=63 // pred_check
          %p525 = pneg %p86
        $region70: #{tpu_custom_call.1} parent=63 // pred_check_branch
          %527 = sbr.rel (%p525) target = $region72
        $region71: #{tpu_custom_call.1} parent=63 // pred_region
          %528 = dma.done %s521, 128
        $region72: #{tpu_custom_call.1} parent=63 // pred_fallthru
          _
        %s529 = sand.u32 %s39, 1
        %s530 = scalar_lea.sflag [#allocation7], %s529
        %s531 = sand.u32 %s99, 1
        %s532 = smul.addr %s531, 8
        %s533 = scalar_lea.vmem [#allocation8], %s532
        // Predicated region
        $region73: #{tpu_custom_call.1} parent=63 // pred_check
          %p534 = pneg %p112
        $region74: #{tpu_custom_call.1} parent=63 // pred_check_branch
          %536 = sbr.rel (%p534) target = $region76
        $region75: #{tpu_custom_call.1} parent=63 // pred_region
          %537 = dma.done %s530, 128
        $region76: #{tpu_custom_call.1} parent=63 // pred_fallthru
          _
        // Predicated region
        $region77: #{tpu_custom_call.1} parent=63 // pred_check
          %p538 = pneg %p133
        $region78: #{tpu_custom_call.1} parent=63 // pred_check_branch
          %540 = sbr.rel (%p538) target = $region80
        $region79: #{tpu_custom_call.1} parent=63 // pred_region
          %541 = dma.done [#allocation10], 256
        $region80: #{tpu_custom_call.1} parent=63 // pred_fallthru
          _
        // Predicated region
        $region81: #{tpu_custom_call.1} parent=63 // pred_check
          %p542 = pneg %p154
        $region82: #{tpu_custom_call.1} parent=63 // pred_check_branch
          %544 = sbr.rel (%p542) target = $region84
        $region83: #{tpu_custom_call.1} parent=63 // pred_region
          %545 = dma.done [#allocation10], 256
        $region84: #{tpu_custom_call.1} parent=63 // pred_fallthru
          _
        // Predicated region
        $region85: #{tpu_custom_call.1} parent=63 // pred_check
          %p546 = pneg %p175
        $region86: #{tpu_custom_call.1} parent=63 // pred_check_branch
          %548 = sbr.rel (%p546) target = $region88
        $region87: #{tpu_custom_call.1} parent=63 // pred_region
          %549 = dma.done [#allocation13], 256
        $region88: #{tpu_custom_call.1} parent=63 // pred_fallthru
          _
        // Predicated region
        $region89: #{tpu_custom_call.1} parent=63 // pred_check
          %p550 = pneg %p196
        $region90: #{tpu_custom_call.1} parent=63 // pred_check_branch
          %552 = sbr.rel (%p550) target = $region92
        $region91: #{tpu_custom_call.1} parent=63 // pred_region
          %553 = dma.done [#allocation13], 48
        $region92: #{tpu_custom_call.1} parent=63 // pred_fallthru
          _
        // Predicated region
        $region93: #{tpu_custom_call.1} parent=63 // pred_check
          %p554 = pneg %p217
        $region94: #{tpu_custom_call.1} parent=63 // pred_check_branch
          %556 = sbr.rel (%p554) target = $region96
        $region95: #{tpu_custom_call.1} parent=63 // pred_region
          %557 = dma.done [#allocation16], 256
        $region96: #{tpu_custom_call.1} parent=63 // pred_fallthru
          _
        // Predicated region
        $region97: #{tpu_custom_call.1} parent=63 // pred_check
          %p558 = pneg %p238
        $region98: #{tpu_custom_call.1} parent=63 // pred_check_branch
          %560 = sbr.rel (%p558) target = $region100
        $region99: #{tpu_custom_call.1} parent=63 // pred_region
          %561 = dma.done [#allocation16], 16
        $region100: #{tpu_custom_call.1} parent=63 // pred_fallthru
          _
        %s562 = sand.u32 %s47, 1
        %s563 = scalar_lea.sflag [#allocation4], %s562
        %s564 = sand.u32 %s47, 1
        %s565 = smul.addr %s564, 8
        %s566 = scalar_lea.vmem [#allocation3], %s565
        %p567 = pneg %p60
        %p568 = pneg %p57
        %s569 = sand.u32 %s39, 1
        %s570 = scalar_lea.sflag [#allocation7], %s569
        %s571 = sand.u32 %s73, 1
        %s572 = smul.addr %s571, 8
        %s573 = scalar_lea.vmem [#allocation6], %s572
        %p574 = pneg %p86
        %p575 = pneg %p83
        %s576 = sand.u32 %s39, 1
        %s577 = scalar_lea.sflag [#allocation7], %s576
        %s578 = sand.u32 %s99, 1
        %s579 = smul.addr %s578, 8
        %s580 = scalar_lea.vmem [#allocation8], %s579
        %p581 = pneg %p112
        %p582 = pneg %p109
        %p583 = pneg %p133
        %p584 = pneg %p130
        %p585 = pneg %p154
        %p586 = pneg %p151
        %p587 = pneg %p175
        %p588 = pneg %p172
        %p589 = pneg %p196
        %p590 = pneg %p193
        %p591 = pneg %p217
        %p592 = pneg %p214
        %p593 = pneg %p238
        %p594 = pneg %p235
        %p595 = pneg %p259
        %p596 = pneg %p256
        %p597 = scmp.lt.s32.totalorder %s39, 1
        %s598 = scalar_select %p597, %s39, 1
        %s599 = scalar_lea.vmem %s10, %s598
        %p600 = pneg %p285
        %p601 = pneg %p282
        %p602 = pneg %p311
        %p603 = pneg %p308
        %s604 = sand.u32 %s298, 1
        %s605 = scalar_lea.sflag [#allocation5], %s604
        %s606 = sand.u32 %s298, 1
        %s607 = smul.addr %s606, 16
        %s608 = scalar_lea.vmem [#allocation18], %s607
        %p609 = pneg %p337
        %p610 = pneg %p334
        %s611 = sand.u32 %s324, 1
        %s612 = scalar_lea.sflag [#allocation20], %s611
        %s613 = sand.u32 %s324, 1
        %s614 = smul.addr %s613, 32
        %s615 = scalar_lea.vmem [#allocation19], %s614
        %p616 = scmp.lt.s32.totalorder %s39, 1
        %s617 = scalar_select %p616, %s39, 1
        %s618 = scalar_lea.vmem %s10, %s617
        %v620 = vld [vmem:[%s515] sm:$0xf]
        %v621 = vld [vmem:[%s515 + $0x4] sm:$0xf]
        %v622 = vld [vmem:[%s524] sm:$0xf]
        %v623 = vld [vmem:[%s524 + $0x4] sm:$0xf]
        %v624 = vld [vmem:[%s533] sm:$0xf]
        %v625 = vld [vmem:[%s533 + $0x4] sm:$0xf]
        %v626 = vld [vmem:[#allocation9] sm:$0xf]
        %v627 = vld [vmem:[#allocation9 + $0x4] sm:$0xf]
        %v628 = vld [vmem:[#allocation9 + $0x8] sm:$0xf]
        %v629 = vld [vmem:[#allocation9 + $0xc] sm:$0xf]
        %v630 = vld [vmem:[#allocation14] sm:$0x1]
        %v632 = vlaneseq
        %v633 = vshrl.u32 %v632, 7
        %v634 = vsub.s32 0, %v633
        %v635 = vrot.slane %v630, %v634
        %v639 = vunpack.c.l.b16 %v620
        %v640 = vunpack.c.l.b16 %v621
        %v641 = vpack.c.b16 %v640, %v639
        %v646 = vunpack.c.l.b16 %v626
        %v647 = vunpack.c.l.b16 %v627
        %v648 = vunpack.c.l.b16 %v628
        %v649 = vunpack.c.l.b16 %v629
        %v650 = vpack.c.b16 %v647, %v646
        %v651 = vpack.c.b16 %v649, %v648
        %vm654 = vcmask 261120
        %v656 = vsel %vm654, %v641, 0
        %658 = vmatprep.subr.bf16.mxu0 0
        %659 = vmatpush1.bf16.msra.mxu0 0
        %660 = vmatprep.subr.bf16.mxu0 0
        %661 = vmatpush1.bf16.msra.mxu0 0
        %662 = vmatprep.subr.bf16.mxu0 0
        %663 = vmatpush1.bf16.msra.mxu0 0
        %664 = vmatprep.subr.bf16.mxu0 0
        %665 = vmatpush1.bf16.msra.mxu0 0
        %666 = vmatprep.subr.bf16.mxu0 0
        %667 = vmatpush1.bf16.msra.mxu0 0
        %668 = vmatprep.subr.bf16.mxu0 0
        %669 = vmatpush1.bf16.msra.mxu0 0
        %670 = vmatprep.subr.bf16.mxu0 0
        %671 = vmatpush1.bf16.msra.mxu0 %v651
        %672 = vmatprep.subr.bf16.mxu0 0
        %673 = vmatpush1.bf16.msra.mxu0 %v650
        %674 = vmatprep.subr.bf16.mxu0 0
        %675 = vmatpush2.bf16.msra.mxu0 0
        %676 = vmatprep.subr.bf16.mxu0 0
        %677 = vmatpush2.bf16.msra.mxu0 0
        %678 = vmatprep.subr.bf16.mxu0 0
        %679 = vmatpush2.bf16.msra.mxu0 0
        %680 = vmatprep.subr.bf16.mxu0 0
        %681 = vmatpush2.bf16.msra.mxu0 0
        %682 = vmatprep.subr.bf16.mxu0 0
        %683 = vmatpush2.bf16.msra.mxu0 0
        %684 = vmatprep.subr.bf16.mxu0 0
        %685 = vmatpush2.bf16.msra.mxu0 0
        %686 = vmatprep.subr.bf16.mxu0 0
        %687 = vmatpush2.bf16.msra.mxu0 0
        %688 = vmatprep.subr.bf16.mxu0 0
        %689 = vmatpush2.bf16.msra.mxu0 0
        %690 = vmatprep.mubr.bf16.mxu0 0
        %691 = vmatmul.mubr.bf16.gmra.mxu0 %v656
        %v692 = vpop.f32.mrf.mxu0
        %v693 = vadd.f32 %v635, %v692
        %v694 = vpop.f32.mrf.mxu0
        %v695 = vpop.f32.mrf.mxu0
        %v696 = vadd.f32 %v635, %v695
        %v697 = vpop.f32.mrf.mxu0
        %698 = vdwg.mxu0
        %v699 = vld [vmem:[#allocation11] sm:$0xf]
        %v700 = vld [vmem:[#allocation11 + $0x4] sm:$0xf]
        %v701 = vld [vmem:[#allocation11 + $0x8] sm:$0xf]
        %v702 = vld [vmem:[#allocation11 + $0xc] sm:$0xf]
        %s703 = scalar_lea.vmem [#allocation14], 1
        %v704 = vld [vmem:[%s703] sm:$0x1]
        %v706 = vlaneseq
        %v707 = vshrl.u32 %v706, 7
        %v708 = vsub.s32 0, %v707
        %v709 = vrot.slane %v704, %v708
        %v713 = vunpack.c.l.b16 %v622
        %v714 = vunpack.c.l.b16 %v623
        %v715 = vpack.c.b16 %v714, %v713
        %v720 = vunpack.c.l.b16 %v699
        %v721 = vunpack.c.l.b16 %v700
        %v722 = vunpack.c.l.b16 %v701
        %v723 = vunpack.c.l.b16 %v702
        %v724 = vpack.c.b16 %v721, %v720
        %v725 = vpack.c.b16 %v723, %v722
        %v729 = vsel %vm654, %v715, 0
        %731 = vmatprep.subr.bf16.mxu0 0
        %732 = vmatpush1.bf16.msra.mxu0 0
        %733 = vmatprep.subr.bf16.mxu0 0
        %734 = vmatpush1.bf16.msra.mxu0 0
        %735 = vmatprep.subr.bf16.mxu0 0
        %736 = vmatpush1.bf16.msra.mxu0 0
        %737 = vmatprep.subr.bf16.mxu0 0
        %738 = vmatpush1.bf16.msra.mxu0 0
        %739 = vmatprep.subr.bf16.mxu0 0
        %740 = vmatpush1.bf16.msra.mxu0 0
        %741 = vmatprep.subr.bf16.mxu0 0
        %742 = vmatpush1.bf16.msra.mxu0 0
        %743 = vmatprep.subr.bf16.mxu0 0
        %744 = vmatpush1.bf16.msra.mxu0 %v725
        %745 = vmatprep.subr.bf16.mxu0 0
        %746 = vmatpush1.bf16.msra.mxu0 %v724
        %747 = vmatprep.subr.bf16.mxu0 0
        %748 = vmatpush2.bf16.msra.mxu0 0
        %749 = vmatprep.subr.bf16.mxu0 0
        %750 = vmatpush2.bf16.msra.mxu0 0
        %751 = vmatprep.subr.bf16.mxu0 0
        %752 = vmatpush2.bf16.msra.mxu0 0
        %753 = vmatprep.subr.bf16.mxu0 0
        %754 = vmatpush2.bf16.msra.mxu0 0
        %755 = vmatprep.subr.bf16.mxu0 0
        %756 = vmatpush2.bf16.msra.mxu0 0
        %757 = vmatprep.subr.bf16.mxu0 0
        %758 = vmatpush2.bf16.msra.mxu0 0
        %759 = vmatprep.subr.bf16.mxu0 0
        %760 = vmatpush2.bf16.msra.mxu0 0
        %761 = vmatprep.subr.bf16.mxu0 0
        %762 = vmatpush2.bf16.msra.mxu0 0
        %763 = vmatprep.mubr.bf16.mxu0 0
        %764 = vmatmul.mubr.bf16.gmra.mxu0 %v729
        %v765 = vpop.f32.mrf.mxu0
        %v766 = vadd.f32 %v709, %v765
        %v767 = vpop.f32.mrf.mxu0
        %v768 = vpop.f32.mrf.mxu0
        %v769 = vadd.f32 %v709, %v768
        %v770 = vpop.f32.mrf.mxu0
        %771 = vdwg.mxu0
        %v772 = vld [vmem:[#allocation12] sm:$0xf]
        %v773 = vld [vmem:[#allocation12 + $0x4] sm:$0xf]
        %v774 = vld [vmem:[#allocation12 + $0x8] sm:$0xf]
        %v775 = vld [vmem:[#allocation12 + $0xc] sm:$0xf]
        %s776 = scalar_lea.vmem [#allocation14], 2
        %v777 = vld [vmem:[%s776] sm:$0x1]
        %v779 = vlaneseq
        %v780 = vshrl.u32 %v779, 7
        %v781 = vsub.s32 0, %v780
        %v782 = vrot.slane %v777, %v781
        %v786 = vunpack.c.l.b16 %v624
        %v787 = vunpack.c.l.b16 %v625
        %v788 = vpack.c.b16 %v787, %v786
        %v793 = vunpack.c.l.b16 %v772
        %v794 = vunpack.c.l.b16 %v773
        %v795 = vunpack.c.l.b16 %v774
        %v796 = vunpack.c.l.b16 %v775
        %v797 = vpack.c.b16 %v794, %v793
        %v798 = vpack.c.b16 %v796, %v795
        %v802 = vsel %vm654, %v788, 0
        %804 = vmatprep.subr.bf16.mxu0 0
        %805 = vmatpush1.bf16.msra.mxu0 0
        %806 = vmatprep.subr.bf16.mxu0 0
        %807 = vmatpush1.bf16.msra.mxu0 0
        %808 = vmatprep.subr.bf16.mxu0 0
        %809 = vmatpush1.bf16.msra.mxu0 0
        %810 = vmatprep.subr.bf16.mxu0 0
        %811 = vmatpush1.bf16.msra.mxu0 0
        %812 = vmatprep.subr.bf16.mxu0 0
        %813 = vmatpush1.bf16.msra.mxu0 0
        %814 = vmatprep.subr.bf16.mxu0 0
        %815 = vmatpush1.bf16.msra.mxu0 0
        %816 = vmatprep.subr.bf16.mxu0 0
        %817 = vmatpush1.bf16.msra.mxu0 %v798
        %818 = vmatprep.subr.bf16.mxu0 0
        %819 = vmatpush1.bf16.msra.mxu0 %v797
        %820 = vmatprep.subr.bf16.mxu0 0
        %821 = vmatpush2.bf16.msra.mxu0 0
        %822 = vmatprep.subr.bf16.mxu0 0
        %823 = vmatpush2.bf16.msra.mxu0 0
        %824 = vmatprep.subr.bf16.mxu0 0
        %825 = vmatpush2.bf16.msra.mxu0 0
        %826 = vmatprep.subr.bf16.mxu0 0
        %827 = vmatpush2.bf16.msra.mxu0 0
        %828 = vmatprep.subr.bf16.mxu0 0
        %829 = vmatpush2.bf16.msra.mxu0 0
        %830 = vmatprep.subr.bf16.mxu0 0
        %831 = vmatpush2.bf16.msra.mxu0 0
        %832 = vmatprep.subr.bf16.mxu0 0
        %833 = vmatpush2.bf16.msra.mxu0 0
        %834 = vmatprep.subr.bf16.mxu0 0
        %835 = vmatpush2.bf16.msra.mxu0 0
        %836 = vmatprep.mubr.bf16.mxu0 0
        %837 = vmatmul.mubr.bf16.gmra.mxu0 %v802
        %v838 = vpop.f32.mrf.mxu0
        %v839 = vadd.f32 %v782, %v838
        %v840 = vpop.f32.mrf.mxu0
        %v841 = vpop.f32.mrf.mxu0
        %v842 = vadd.f32 %v782, %v841
        %v843 = vpop.f32.mrf.mxu0
        %844 = vdwg.mxu0
        %v845 = vld [vmem:[%s9] sm:$0xff]
        %v846 = vld [vmem:[%s9 + $0x8] sm:$0xff]
        %v847 = vld [vmem:[%s618] sm:$0x1]
        %v849 = vlaneseq
        %v850 = vshrl.u32 %v849, 7
        %v851 = vsub.s32 0, %v850
        %v852 = vrot.slane %v847, %v851
        %v854 = vadd.f32 %v845, %v852
        %v855 = vadd.f32 %v846, %v852
        %v856 = vpack.c.bf16 %v696, %v693
        %v857 = vpack.c.bf16 %v769, %v766
        %v858 = vpack.c.bf16 %v842, %v839
        %vm859 = vcmask 64512
        %v861 = vsel %vm859, %v856, 0
        %v864 = vsel %vm859, %v857, 0
        %866 = vmatprep.subr.bf16.mxu0 0
        %867 = vmatpush1.bf16.xpose.msra.mxu0 0
        %868 = vmatprep.subr.bf16.mxu0 0
        %869 = vmatpush1.bf16.xpose.msra.mxu0 0
        %870 = vmatprep.subr.bf16.mxu0 0
        %871 = vmatpush1.bf16.xpose.msra.mxu0 0
        %872 = vmatprep.subr.bf16.mxu0 0
        %873 = vmatpush1.bf16.xpose.msra.mxu0 0
        %874 = vmatprep.subr.bf16.mxu0 0
        %875 = vmatpush1.bf16.xpose.msra.mxu0 0
        %876 = vmatprep.subr.bf16.mxu0 0
        %877 = vmatpush1.bf16.xpose.msra.mxu0 0
        %878 = vmatprep.subr.bf16.mxu0 0
        %879 = vmatpush1.bf16.xpose.msra.mxu0 0
        %880 = vmatprep.subr.bf16.mxu0 0
        %881 = vmatpush1.bf16.xpose.msra.mxu0 %v864
        %882 = vmatprep.subr.bf16.mxu0 0
        %883 = vmatpush2.bf16.xpose.msra.mxu0 0
        %884 = vmatprep.subr.bf16.mxu0 0
        %885 = vmatpush2.bf16.xpose.msra.mxu0 0
        %886 = vmatprep.subr.bf16.mxu0 0
        %887 = vmatpush2.bf16.xpose.msra.mxu0 0
        %888 = vmatprep.subr.bf16.mxu0 0
        %889 = vmatpush2.bf16.xpose.msra.mxu0 0
        %890 = vmatprep.subr.bf16.mxu0 0
        %891 = vmatpush2.bf16.xpose.msra.mxu0 0
        %892 = vmatprep.subr.bf16.mxu0 0
        %893 = vmatpush2.bf16.xpose.msra.mxu0 0
        %894 = vmatprep.subr.bf16.mxu0 0
        %895 = vmatpush2.bf16.xpose.msra.mxu0 0
        %896 = vmatprep.subr.bf16.mxu0 0
        %897 = vmatpush2.bf16.xpose.msra.mxu0 0
        %898 = vmatprep.mubr.bf16.mxu0 0
        %899 = vmatmul.mubr.bf16.gmra.mxu0 %v861
        %v900 = vpop.f32.mrf.mxu0
        %v901 = vadd.f32 %v854, %v900
        %v902 = vpop.f32.mrf.mxu0
        %v903 = vpop.f32.mrf.mxu0
        %v904 = vadd.f32 %v855, %v903
        %v905 = vpop.f32.mrf.mxu0
        %906 = vdwg.mxu0
        %vm907 = vcmask 130048
        %v908 = vsel %vm907, %v901, -inf
        %909 = vmax.xlane.f32.xlu0 %v908
        %v910 = vpop.xlane.xlu0 %909
        %v911 = vsel %vm907, %v904, -inf
        %912 = vmax.xlane.f32.xlu0 %v911
        %v913 = vpop.xlane.xlu0 %912
        %v914 = vsub.f32 %v901, %v910
        %v915 = vsub.f32 %v904, %v913
        %v916 = vmul.f32 %v914, 1.442695
        %v917 = vpow.pop %v916
        %v918 = vmul.f32 %v915, 1.442695
        %v919 = vpow.pop %v918
        %v920 = vsel %vm907, %v917, 0.0
        %921 = vadd.xlane.f32.xlu0 %v920
        %v922 = vpop.xlane.xlu0 %921
        %v923 = vsel %vm907, %v919, 0.0
        %924 = vadd.xlane.f32.xlu0 %v923
        %v925 = vpop.xlane.xlu0 %924
        %v926 = vrcp.pop %v922
        %v927 = vrcp.pop %v925
        %v928 = vmul.f32 %v917, %v926
        %v929 = vmul.f32 %v919, %v927
        %v930 = vpack.c.bf16 %v929, %v928
        %v932 = vunpack.c.l.b16 %v930
        %v933 = vunpack.c.h.b16 %v930
        %v934 = vpack.c.b16 %v932, %v932
        %v935 = vpack.c.b16 %v933, %v933
        %vm938 = vcmask 125952
        %939 = vst.msk [vmem:[%s615] sm:$0xf] %vm938, %v934
        %940 = vst.msk [vmem:[%s615 + $0x4] sm:$0xf] %vm938, %v935
        %v942 = vsel %vm907, %v930, 0
        %944 = vmatprep.subr.bf16.mxu0 0
        %945 = vmatpush1.bf16.msra.mxu0 0
        %946 = vmatprep.subr.bf16.mxu0 0
        %947 = vmatpush1.bf16.msra.mxu0 0
        %948 = vmatprep.subr.bf16.mxu0 0
        %949 = vmatpush1.bf16.msra.mxu0 0
        %950 = vmatprep.subr.bf16.mxu0 0
        %951 = vmatpush1.bf16.msra.mxu0 0
        %952 = vmatprep.subr.bf16.mxu0 0
        %953 = vmatpush1.bf16.msra.mxu0 0
        %954 = vmatprep.subr.bf16.mxu0 0
        %955 = vmatpush1.bf16.msra.mxu0 0
        %956 = vmatprep.subr.bf16.mxu0 0
        %957 = vmatpush1.bf16.msra.mxu0 0
        %958 = vmatprep.subr.bf16.mxu0 0
        %959 = vmatpush1.bf16.msra.mxu0 %v858
        %960 = vmatprep.subr.bf16.mxu0 0
        %961 = vmatpush2.bf16.msra.mxu0 0
        %962 = vmatprep.subr.bf16.mxu0 0
        %963 = vmatpush2.bf16.msra.mxu0 0
        %964 = vmatprep.subr.bf16.mxu0 0
        %965 = vmatpush2.bf16.msra.mxu0 0
        %966 = vmatprep.subr.bf16.mxu0 0
        %967 = vmatpush2.bf16.msra.mxu0 0
        %968 = vmatprep.subr.bf16.mxu0 0
        %969 = vmatpush2.bf16.msra.mxu0 0
        %970 = vmatprep.subr.bf16.mxu0 0
        %971 = vmatpush2.bf16.msra.mxu0 0
        %972 = vmatprep.subr.bf16.mxu0 0
        %973 = vmatpush2.bf16.msra.mxu0 0
        %974 = vmatprep.subr.bf16.mxu0 0
        %975 = vmatpush2.bf16.msra.mxu0 0
        %976 = vmatprep.mubr.bf16.mxu0 0
        %977 = vmatmul.mubr.bf16.gmra.mxu0 %v942
        %v978 = vpop.f32.mrf.mxu0
        %v979 = vadd.f32 0.0, %v978
        %v980 = vpop.f32.mrf.mxu0
        %v981 = vpop.f32.mrf.mxu0
        %v982 = vadd.f32 0.0, %v981
        %v983 = vpop.f32.mrf.mxu0
        %984 = vdwg.mxu0
        %v985 = vpack.c.bf16 %v982, %v979
        %v987 = vunpack.c.l.b16 %v985
        %v988 = vunpack.c.h.b16 %v985
        %v989 = vpack.c.b16 %v987, %v987
        %v990 = vpack.c.b16 %v988, %v988
        %vm993 = vcmask 60416
        %994 = vst.msk [vmem:[#allocation2] sm:$0xf] %vm993, %v989
        %995 = vst.msk [vmem:[#allocation2 + $0x4] sm:$0xf] %vm993, %v990
        %997 = vrot.lane.b32.xlu0 %v856, 120
        %v998 = vpop.permute.xlu0 %997
        %1000 = vrot.lane.b32.xlu0 %v857, 120
        %v1001 = vpop.permute.xlu0 %1000
        %v1003 = vsel %vm859, %v998, 0
        %v1006 = vsel %vm859, %v1001, 0
        %1008 = vmatprep.subr.bf16.mxu0 0
        %1009 = vmatpush1.bf16.xpose.msra.mxu0 0
        %1010 = vmatprep.subr.bf16.mxu0 0
        %1011 = vmatpush1.bf16.xpose.msra.mxu0 0
        %1012 = vmatprep.subr.bf16.mxu0 0
        %1013 = vmatpush1.bf16.xpose.msra.mxu0 0
        %1014 = vmatprep.subr.bf16.mxu0 0
        %1015 = vmatpush1.bf16.xpose.msra.mxu0 0
        %1016 = vmatprep.subr.bf16.mxu0 0
        %1017 = vmatpush1.bf16.xpose.msra.mxu0 0
        %1018 = vmatprep.subr.bf16.mxu0 0
        %1019 = vmatpush1.bf16.xpose.msra.mxu0 0
        %1020 = vmatprep.subr.bf16.mxu0 0
        %1021 = vmatpush1.bf16.xpose.msra.mxu0 0
        %1022 = vmatprep.subr.bf16.mxu0 0
        %1023 = vmatpush1.bf16.xpose.msra.mxu0 %v1006
        %1024 = vmatprep.subr.bf16.mxu0 0
        %1025 = vmatpush2.bf16.xpose.msra.mxu0 0
        %1026 = vmatprep.subr.bf16.mxu0 0
        %1027 = vmatpush2.bf16.xpose.msra.mxu0 0
        %1028 = vmatprep.subr.bf16.mxu0 0
        %1029 = vmatpush2.bf16.xpose.msra.mxu0 0
        %1030 = vmatprep.subr.bf16.mxu0 0
        %1031 = vmatpush2.bf16.xpose.msra.mxu0 0
        %1032 = vmatprep.subr.bf16.mxu0 0
        %1033 = vmatpush2.bf16.xpose.msra.mxu0 0
        %1034 = vmatprep.subr.bf16.mxu0 0
        %1035 = vmatpush2.bf16.xpose.msra.mxu0 0
        %1036 = vmatprep.subr.bf16.mxu0 0
        %1037 = vmatpush2.bf16.xpose.msra.mxu0 0
        %1038 = vmatprep.subr.bf16.mxu0 0
        %1039 = vmatpush2.bf16.xpose.msra.mxu0 0
        %1040 = vmatprep.mubr.bf16.mxu0 0
        %1041 = vmatmul.mubr.bf16.gmra.mxu0 %v1003
        %v1042 = vpop.f32.mrf.mxu0
        %v1043 = vadd.f32 %v854, %v1042
        %v1044 = vpop.f32.mrf.mxu0
        %v1045 = vpop.f32.mrf.mxu0
        %v1046 = vadd.f32 %v855, %v1045
        %v1047 = vpop.f32.mrf.mxu0
        %1048 = vdwg.mxu0
        %v1049 = vsel %vm907, %v1043, -inf
        %1050 = vmax.xlane.f32.xlu0 %v1049
        %v1051 = vpop.xlane.xlu0 %1050
        %v1052 = vsel %vm907, %v1046, -inf
        %1053 = vmax.xlane.f32.xlu0 %v1052
        %v1054 = vpop.xlane.xlu0 %1053
        %v1055 = vsub.f32 %v1043, %v1051
        %v1056 = vsub.f32 %v1046, %v1054
        %v1057 = vmul.f32 %v1055, 1.442695
        %v1058 = vpow.pop %v1057
        %v1059 = vmul.f32 %v1056, 1.442695
        %v1060 = vpow.pop %v1059
        %v1061 = vsel %vm907, %v1058, 0.0
        %1062 = vadd.xlane.f32.xlu0 %v1061
        %v1063 = vpop.xlane.xlu0 %1062
        %v1064 = vsel %vm907, %v1060, 0.0
        %1065 = vadd.xlane.f32.xlu0 %v1064
        %v1066 = vpop.xlane.xlu0 %1065
        %v1067 = vrcp.pop %v1063
        %v1068 = vrcp.pop %v1066
        %v1069 = vmul.f32 %v1058, %v1067
        %v1070 = vmul.f32 %v1060, %v1068
        %v1071 = vpack.c.bf16 %v1070, %v1069
        %v1073 = vunpack.c.l.b16 %v1071
        %v1074 = vunpack.c.h.b16 %v1071
        %v1075 = vpack.c.b16 %v1073, %v1073
        %v1076 = vpack.c.b16 %v1074, %v1074
        %s1079 = scalar_lea.vmem %s615, 8 [#allocation19]
        %1080 = vst.msk [vmem:[%s1079] sm:$0xf] %vm938, %v1075
        %1081 = vst.msk [vmem:[%s1079 + $0x4] sm:$0xf] %vm938, %v1076
        %1083 = vrot.lane.b32.xlu0 %v858, 120
        %v1084 = vpop.permute.xlu0 %1083
        %v1087 = vsel %vm907, %v1071, 0
        %1089 = vmatprep.subr.bf16.mxu0 0
        %1090 = vmatpush1.bf16.msra.mxu0 0
        %1091 = vmatprep.subr.bf16.mxu0 0
        %1092 = vmatpush1.bf16.msra.mxu0 0
        %1093 = vmatprep.subr.bf16.mxu0 0
        %1094 = vmatpush1.bf16.msra.mxu0 0
        %1095 = vmatprep.subr.bf16.mxu0 0
        %1096 = vmatpush1.bf16.msra.mxu0 0
        %1097 = vmatprep.subr.bf16.mxu0 0
        %1098 = vmatpush1.bf16.msra.mxu0 0
        %1099 = vmatprep.subr.bf16.mxu0 0
        %1100 = vmatpush1.bf16.msra.mxu0 0
        %1101 = vmatprep.subr.bf16.mxu0 0
        %1102 = vmatpush1.bf16.msra.mxu0 0
        %1103 = vmatprep.subr.bf16.mxu0 0
        %1104 = vmatpush1.bf16.msra.mxu0 %v1084
        %1105 = vmatprep.subr.bf16.mxu0 0
        %1106 = vmatpush2.bf16.msra.mxu0 0
        %1107 = vmatprep.subr.bf16.mxu0 0
        %1108 = vmatpush2.bf16.msra.mxu0 0
        %1109 = vmatprep.subr.bf16.mxu0 0
        %1110 = vmatpush2.bf16.msra.mxu0 0
        %1111 = vmatprep.subr.bf16.mxu0 0
        %1112 = vmatpush2.bf16.msra.mxu0 0
        %1113 = vmatprep.subr.bf16.mxu0 0
        %1114 = vmatpush2.bf16.msra.mxu0 0
        %1115 = vmatprep.subr.bf16.mxu0 0
        %1116 = vmatpush2.bf16.msra.mxu0 0
        %1117 = vmatprep.subr.bf16.mxu0 0
        %1118 = vmatpush2.bf16.msra.mxu0 0
        %1119 = vmatprep.subr.bf16.mxu0 0
        %1120 = vmatpush2.bf16.msra.mxu0 0
        %1121 = vmatprep.mubr.bf16.mxu0 0
        %1122 = vmatmul.mubr.bf16.gmra.mxu0 %v1087
        %v1123 = vpop.f32.mrf.mxu0
        %v1124 = vadd.f32 0.0, %v1123
        %v1125 = vpop.f32.mrf.mxu0
        %v1126 = vpop.f32.mrf.mxu0
        %v1127 = vadd.f32 0.0, %v1126
        %v1128 = vpop.f32.mrf.mxu0
        %1129 = vdwg.mxu0
        %v1130 = vpack.c.bf16 %v1127, %v1124
        %v1132 = vunpack.c.l.b16 %v1130
        %v1133 = vunpack.c.h.b16 %v1130
        %v1134 = vpack.c.b16 %v1132, %v1132
        %v1135 = vpack.c.b16 %v1133, %v1133
        %1136 = vrot.lane.b32.xlu0 %v1134, 8
        %v1137 = vpop.permute.xlu0 %1136
        %1138 = vrot.lane.b32.xlu0 %v1135, 8
        %v1139 = vpop.permute.xlu0 %1138
        %vm1142 = vcmask 126016
        %1143 = vst.msk [vmem:[#allocation2] sm:$0xf] %vm1142, %v1137
        %1144 = vst.msk [vmem:[#allocation2 + $0x4] sm:$0xf] %vm1142, %v1139
        %1145 = vrot.lane.b32.xlu0 %v856, 112
        %v1146 = vpop.permute.xlu0 %1145
        %1147 = vrot.lane.b32.xlu0 %v857, 112
        %v1148 = vpop.permute.xlu0 %1147
        %v1150 = vsel %vm859, %v1146, 0
        %v1153 = vsel %vm859, %v1148, 0
        %1155 = vmatprep.subr.bf16.mxu0 0
        %1156 = vmatpush1.bf16.xpose.msra.mxu0 0
        %1157 = vmatprep.subr.bf16.mxu0 0
        %1158 = vmatpush1.bf16.xpose.msra.mxu0 0
        %1159 = vmatprep.subr.bf16.mxu0 0
        %1160 = vmatpush1.bf16.xpose.msra.mxu0 0
        %1161 = vmatprep.subr.bf16.mxu0 0
        %1162 = vmatpush1.bf16.xpose.msra.mxu0 0
        %1163 = vmatprep.subr.bf16.mxu0 0
        %1164 = vmatpush1.bf16.xpose.msra.mxu0 0
        %1165 = vmatprep.subr.bf16.mxu0 0
        %1166 = vmatpush1.bf16.xpose.msra.mxu0 0
        %1167 = vmatprep.subr.bf16.mxu0 0
        %1168 = vmatpush1.bf16.xpose.msra.mxu0 0
        %1169 = vmatprep.subr.bf16.mxu0 0
        %1170 = vmatpush1.bf16.xpose.msra.mxu0 %v1153
        %1171 = vmatprep.subr.bf16.mxu0 0
        %1172 = vmatpush2.bf16.xpose.msra.mxu0 0
        %1173 = vmatprep.subr.bf16.mxu0 0
        %1174 = vmatpush2.bf16.xpose.msra.mxu0 0
        %1175 = vmatprep.subr.bf16.mxu0 0
        %1176 = vmatpush2.bf16.xpose.msra.mxu0 0
        %1177 = vmatprep.subr.bf16.mxu0 0
        %1178 = vmatpush2.bf16.xpose.msra.mxu0 0
        %1179 = vmatprep.subr.bf16.mxu0 0
        %1180 = vmatpush2.bf16.xpose.msra.mxu0 0
        %1181 = vmatprep.subr.bf16.mxu0 0
        %1182 = vmatpush2.bf16.xpose.msra.mxu0 0
        %1183 = vmatprep.subr.bf16.mxu0 0
        %1184 = vmatpush2.bf16.xpose.msra.mxu0 0
        %1185 = vmatprep.subr.bf16.mxu0 0
        %1186 = vmatpush2.bf16.xpose.msra.mxu0 0
        %1187 = vmatprep.mubr.bf16.mxu0 0
        %1188 = vmatmul.mubr.bf16.gmra.mxu0 %v1150
        %v1189 = vpop.f32.mrf.mxu0
        %v1190 = vadd.f32 %v854, %v1189
        %v1191 = vpop.f32.mrf.mxu0
        %v1192 = vpop.f32.mrf.mxu0
        %v1193 = vadd.f32 %v855, %v1192
        %v1194 = vpop.f32.mrf.mxu0
        %1195 = vdwg.mxu0
        %v1196 = vsel %vm907, %v1190, -inf
        %1197 = vmax.xlane.f32.xlu0 %v1196
        %v1198 = vpop.xlane.xlu0 %1197
        %v1199 = vsel %vm907, %v1193, -inf
        %1200 = vmax.xlane.f32.xlu0 %v1199
        %v1201 = vpop.xlane.xlu0 %1200
        %v1202 = vsub.f32 %v1190, %v1198
        %v1203 = vsub.f32 %v1193, %v1201
        %v1204 = vmul.f32 %v1202, 1.442695
        %v1205 = vpow.pop %v1204
        %v1206 = vmul.f32 %v1203, 1.442695
        %v1207 = vpow.pop %v1206
        %v1208 = vsel %vm907, %v1205, 0.0
        %1209 = vadd.xlane.f32.xlu0 %v1208
        %v1210 = vpop.xlane.xlu0 %1209
        %v1211 = vsel %vm907, %v1207, 0.0
        %1212 = vadd.xlane.f32.xlu0 %v1211
        %v1213 = vpop.xlane.xlu0 %1212
        %v1214 = vrcp.pop %v1210
        %v1215 = vrcp.pop %v1213
        %v1216 = vmul.f32 %v1205, %v1214
        %v1217 = vmul.f32 %v1207, %v1215
        %v1218 = vpack.c.bf16 %v1217, %v1216
        %v1220 = vunpack.c.l.b16 %v1218
        %v1221 = vunpack.c.h.b16 %v1218
        %v1222 = vpack.c.b16 %v1220, %v1220
        %v1223 = vpack.c.b16 %v1221, %v1221
        %s1226 = scalar_lea.vmem %s615, 16 [#allocation19]
        %1227 = vst.msk [vmem:[%s1226] sm:$0xf] %vm938, %v1222
        %1228 = vst.msk [vmem:[%s1226 + $0x4] sm:$0xf] %vm938, %v1223
        %1229 = vrot.lane.b32.xlu0 %v858, 112
        %v1230 = vpop.permute.xlu0 %1229
        %v1233 = vsel %vm907, %v1218, 0
        %1235 = vmatprep.subr.bf16.mxu0 0
        %1236 = vmatpush1.bf16.msra.mxu0 0
        %1237 = vmatprep.subr.bf16.mxu0 0
        %1238 = vmatpush1.bf16.msra.mxu0 0
        %1239 = vmatprep.subr.bf16.mxu0 0
        %1240 = vmatpush1.bf16.msra.mxu0 0
        %1241 = vmatprep.subr.bf16.mxu0 0
        %1242 = vmatpush1.bf16.msra.mxu0 0
        %1243 = vmatprep.subr.bf16.mxu0 0
        %1244 = vmatpush1.bf16.msra.mxu0 0
        %1245 = vmatprep.subr.bf16.mxu0 0
        %1246 = vmatpush1.bf16.msra.mxu0 0
        %1247 = vmatprep.subr.bf16.mxu0 0
        %1248 = vmatpush1.bf16.msra.mxu0 0
        %1249 = vmatprep.subr.bf16.mxu0 0
        %1250 = vmatpush1.bf16.msra.mxu0 %v1230
        %1251 = vmatprep.subr.bf16.mxu0 0
        %1252 = vmatpush2.bf16.msra.mxu0 0
        %1253 = vmatprep.subr.bf16.mxu0 0
        %1254 = vmatpush2.bf16.msra.mxu0 0
        %1255 = vmatprep.subr.bf16.mxu0 0
        %1256 = vmatpush2.bf16.msra.mxu0 0
        %1257 = vmatprep.subr.bf16.mxu0 0
        %1258 = vmatpush2.bf16.msra.mxu0 0
        %1259 = vmatprep.subr.bf16.mxu0 0
        %1260 = vmatpush2.bf16.msra.mxu0 0
        %1261 = vmatprep.subr.bf16.mxu0 0
        %1262 = vmatpush2.bf16.msra.mxu0 0
        %1263 = vmatprep.subr.bf16.mxu0 0
        %1264 = vmatpush2.bf16.msra.mxu0 0
        %1265 = vmatprep.subr.bf16.mxu0 0
        %1266 = vmatpush2.bf16.msra.mxu0 0
        %1267 = vmatprep.mubr.bf16.mxu0 0
        %1268 = vmatmul.mubr.bf16.gmra.mxu0 %v1233
        %v1269 = vpop.f32.mrf.mxu0
        %v1270 = vadd.f32 0.0, %v1269
        %v1271 = vpop.f32.mrf.mxu0
        %v1272 = vpop.f32.mrf.mxu0
        %v1273 = vadd.f32 0.0, %v1272
        %v1274 = vpop.f32.mrf.mxu0
        %1275 = vdwg.mxu0
        %v1276 = vpack.c.bf16 %v1273, %v1270
        %v1278 = vunpack.c.l.b16 %v1276
        %v1279 = vunpack.c.h.b16 %v1276
        %v1280 = vpack.c.b16 %v1278, %v1278
        %v1281 = vpack.c.b16 %v1279, %v1279
        %1282 = vrot.lane.b32.xlu0 %v1280, 16
        %v1283 = vpop.permute.xlu0 %1282
        %1284 = vrot.lane.b32.xlu0 %v1281, 16
        %v1285 = vpop.permute.xlu0 %1284
        %vm1288 = vcmask 191616
        %1289 = vst.msk [vmem:[#allocation2] sm:$0xf] %vm1288, %v1283
        %1290 = vst.msk [vmem:[#allocation2 + $0x4] sm:$0xf] %vm1288, %v1285
        %1291 = vrot.lane.b32.xlu0 %v856, 104
        %v1292 = vpop.permute.xlu0 %1291
        %1293 = vrot.lane.b32.xlu0 %v857, 104
        %v1294 = vpop.permute.xlu0 %1293
        %v1296 = vsel %vm859, %v1292, 0
        %v1299 = vsel %vm859, %v1294, 0
        %1301 = vmatprep.subr.bf16.mxu0 0
        %1302 = vmatpush1.bf16.xpose.msra.mxu0 0
        %1303 = vmatprep.subr.bf16.mxu0 0
        %1304 = vmatpush1.bf16.xpose.msra.mxu0 0
        %1305 = vmatprep.subr.bf16.mxu0 0
        %1306 = vmatpush1.bf16.xpose.msra.mxu0 0
        %1307 = vmatprep.subr.bf16.mxu0 0
        %1308 = vmatpush1.bf16.xpose.msra.mxu0 0
        %1309 = vmatprep.subr.bf16.mxu0 0
        %1310 = vmatpush1.bf16.xpose.msra.mxu0 0
        %1311 = vmatprep.subr.bf16.mxu0 0
        %1312 = vmatpush1.bf16.xpose.msra.mxu0 0
        %1313 = vmatprep.subr.bf16.mxu0 0
        %1314 = vmatpush1.bf16.xpose.msra.mxu0 0
        %1315 = vmatprep.subr.bf16.mxu0 0
        %1316 = vmatpush1.bf16.xpose.msra.mxu0 %v1299
        %1317 = vmatprep.subr.bf16.mxu0 0
        %1318 = vmatpush2.bf16.xpose.msra.mxu0 0
        %1319 = vmatprep.subr.bf16.mxu0 0
        %1320 = vmatpush2.bf16.xpose.msra.mxu0 0
        %1321 = vmatprep.subr.bf16.mxu0 0
        %1322 = vmatpush2.bf16.xpose.msra.mxu0 0
        %1323 = vmatprep.subr.bf16.mxu0 0
        %1324 = vmatpush2.bf16.xpose.msra.mxu0 0
        %1325 = vmatprep.subr.bf16.mxu0 0
        %1326 = vmatpush2.bf16.xpose.msra.mxu0 0
        %1327 = vmatprep.subr.bf16.mxu0 0
        %1328 = vmatpush2.bf16.xpose.msra.mxu0 0
        %1329 = vmatprep.subr.bf16.mxu0 0
        %1330 = vmatpush2.bf16.xpose.msra.mxu0 0
        %1331 = vmatprep.subr.bf16.mxu0 0
        %1332 = vmatpush2.bf16.xpose.msra.mxu0 0
        %1333 = vmatprep.mubr.bf16.mxu0 0
        %1334 = vmatmul.mubr.bf16.gmra.mxu0 %v1296
        %v1335 = vpop.f32.mrf.mxu0
        %v1336 = vadd.f32 %v854, %v1335
        %v1337 = vpop.f32.mrf.mxu0
        %v1338 = vpop.f32.mrf.mxu0
        %v1339 = vadd.f32 %v855, %v1338
        %v1340 = vpop.f32.mrf.mxu0
        %1341 = vdwg.mxu0
        %v1342 = vsel %vm907, %v1336, -inf
        %1343 = vmax.xlane.f32.xlu0 %v1342
        %v1344 = vpop.xlane.xlu0 %1343
        %v1345 = vsel %vm907, %v1339, -inf
        %1346 = vmax.xlane.f32.xlu0 %v1345
        %v1347 = vpop.xlane.xlu0 %1346
        %v1348 = vsub.f32 %v1336, %v1344
        %v1349 = vsub.f32 %v1339, %v1347
        %v1350 = vmul.f32 %v1348, 1.442695
        %v1351 = vpow.pop %v1350
        %v1352 = vmul.f32 %v1349, 1.442695
        %v1353 = vpow.pop %v1352
        %v1354 = vsel %vm907, %v1351, 0.0
        %1355 = vadd.xlane.f32.xlu0 %v1354
        %v1356 = vpop.xlane.xlu0 %1355
        %v1357 = vsel %vm907, %v1353, 0.0
        %1358 = vadd.xlane.f32.xlu0 %v1357
        %v1359 = vpop.xlane.xlu0 %1358
        %v1360 = vrcp.pop %v1356
        %v1361 = vrcp.pop %v1359
        %v1362 = vmul.f32 %v1351, %v1360
        %v1363 = vmul.f32 %v1353, %v1361
        %v1364 = vpack.c.bf16 %v1363, %v1362
        %v1366 = vunpack.c.l.b16 %v1364
        %v1367 = vunpack.c.h.b16 %v1364
        %v1368 = vpack.c.b16 %v1366, %v1366
        %v1369 = vpack.c.b16 %v1367, %v1367
        %s1372 = scalar_lea.vmem %s615, 24 [#allocation19]
        %1373 = vst.msk [vmem:[%s1372] sm:$0xf] %vm938, %v1368
        %1374 = vst.msk [vmem:[%s1372 + $0x4] sm:$0xf] %vm938, %v1369
        %1375 = vrot.lane.b32.xlu0 %v858, 104
        %v1376 = vpop.permute.xlu0 %1375
        %v1379 = vsel %vm907, %v1364, 0
        %1381 = vmatprep.subr.bf16.mxu0 0
        %1382 = vmatpush1.bf16.msra.mxu0 0
        %1383 = vmatprep.subr.bf16.mxu0 0
        %1384 = vmatpush1.bf16.msra.mxu0 0
        %1385 = vmatprep.subr.bf16.mxu0 0
        %1386 = vmatpush1.bf16.msra.mxu0 0
        %1387 = vmatprep.subr.bf16.mxu0 0
        %1388 = vmatpush1.bf16.msra.mxu0 0
        %1389 = vmatprep.subr.bf16.mxu0 0
        %1390 = vmatpush1.bf16.msra.mxu0 0
        %1391 = vmatprep.subr.bf16.mxu0 0
        %1392 = vmatpush1.bf16.msra.mxu0 0
        %1393 = vmatprep.subr.bf16.mxu0 0
        %1394 = vmatpush1.bf16.msra.mxu0 0
        %1395 = vmatprep.subr.bf16.mxu0 0
        %1396 = vmatpush1.bf16.msra.mxu0 %v1376
        %1397 = vmatprep.subr.bf16.mxu0 0
        %1398 = vmatpush2.bf16.msra.mxu0 0
        %1399 = vmatprep.subr.bf16.mxu0 0
        %1400 = vmatpush2.bf16.msra.mxu0 0
        %1401 = vmatprep.subr.bf16.mxu0 0
        %1402 = vmatpush2.bf16.msra.mxu0 0
        %1403 = vmatprep.subr.bf16.mxu0 0
        %1404 = vmatpush2.bf16.msra.mxu0 0
        %1405 = vmatprep.subr.bf16.mxu0 0
        %1406 = vmatpush2.bf16.msra.mxu0 0
        %1407 = vmatprep.subr.bf16.mxu0 0
        %1408 = vmatpush2.bf16.msra.mxu0 0
        %1409 = vmatprep.subr.bf16.mxu0 0
        %1410 = vmatpush2.bf16.msra.mxu0 0
        %1411 = vmatprep.subr.bf16.mxu0 0
        %1412 = vmatpush2.bf16.msra.mxu0 0
        %1413 = vmatprep.mubr.bf16.mxu0 0
        %1414 = vmatmul.mubr.bf16.gmra.mxu0 %v1379
        %v1415 = vpop.f32.mrf.mxu0
        %v1416 = vadd.f32 0.0, %v1415
        %v1417 = vpop.f32.mrf.mxu0
        %v1418 = vpop.f32.mrf.mxu0
        %v1419 = vadd.f32 0.0, %v1418
        %v1420 = vpop.f32.mrf.mxu0
        %1421 = vdwg.mxu0
        %v1422 = vpack.c.bf16 %v1419, %v1416
        %v1424 = vunpack.c.l.b16 %v1422
        %v1425 = vunpack.c.h.b16 %v1422
        %v1426 = vpack.c.b16 %v1424, %v1424
        %v1427 = vpack.c.b16 %v1425, %v1425
        %1428 = vrot.lane.b32.xlu0 %v1426, 24
        %v1429 = vpop.permute.xlu0 %1428
        %1430 = vrot.lane.b32.xlu0 %v1427, 24
        %v1431 = vpop.permute.xlu0 %1430
        %vm1434 = vcmask 257216
        %1435 = vst.msk [vmem:[#allocation2] sm:$0xf] %vm1434, %v1429
        %1436 = vst.msk [vmem:[#allocation2 + $0x4] sm:$0xf] %vm1434, %v1431
        %v1437 = vld [vmem:[#allocation2] sm:$0xf]
        %v1438 = vld [vmem:[#allocation2 + $0x4] sm:$0xf]
        %v1439 = vld [vmem:[#allocation15] sm:$0xf]
        %v1440 = vld [vmem:[#allocation15 + $0x4] sm:$0xf]
        %v1441 = vld [vmem:[#allocation15 + $0x8] sm:$0xf]
        %v1442 = vld [vmem:[#allocation15 + $0xc] sm:$0xf]
        %v1443 = vld [vmem:[#allocation17] sm:$0x1]
        %v1445 = vlaneseq
        %v1446 = vshrl.u32 %v1445, 7
        %v1447 = vsub.s32 0, %v1446
        %v1448 = vrot.slane %v1443, %v1447
        %v1452 = vunpack.c.l.b16 %v1437
        %v1453 = vunpack.c.l.b16 %v1438
        %v1454 = vpack.c.b16 %v1453, %v1452
        %v1459 = vunpack.c.l.b16 %v1439
        %v1460 = vunpack.c.l.b16 %v1440
        %v1461 = vunpack.c.l.b16 %v1441
        %v1462 = vunpack.c.l.b16 %v1442
        %v1463 = vpack.c.b16 %v1460, %v1459
        %v1464 = vpack.c.b16 %v1462, %v1461
        %v1468 = vsel %vm654, %v1454, 0
        %1470 = vmatprep.subr.bf16.mxu0 0
        %1471 = vmatpush1.bf16.msra.mxu0 0
        %1472 = vmatprep.subr.bf16.mxu0 0
        %1473 = vmatpush1.bf16.msra.mxu0 0
        %1474 = vmatprep.subr.bf16.mxu0 0
        %1475 = vmatpush1.bf16.msra.mxu0 0
        %1476 = vmatprep.subr.bf16.mxu0 0
        %1477 = vmatpush1.bf16.msra.mxu0 0
        %1478 = vmatprep.subr.bf16.mxu0 0
        %1479 = vmatpush1.bf16.msra.mxu0 0
        %1480 = vmatprep.subr.bf16.mxu0 0
        %1481 = vmatpush1.bf16.msra.mxu0 0
        %1482 = vmatprep.subr.bf16.mxu0 0
        %1483 = vmatpush1.bf16.msra.mxu0 %v1464
        %1484 = vmatprep.subr.bf16.mxu0 0
        %1485 = vmatpush1.bf16.msra.mxu0 %v1463
        %1486 = vmatprep.subr.bf16.mxu0 0
        %1487 = vmatpush2.bf16.msra.mxu0 0
        %1488 = vmatprep.subr.bf16.mxu0 0
        %1489 = vmatpush2.bf16.msra.mxu0 0
        %1490 = vmatprep.subr.bf16.mxu0 0
        %1491 = vmatpush2.bf16.msra.mxu0 0
        %1492 = vmatprep.subr.bf16.mxu0 0
        %1493 = vmatpush2.bf16.msra.mxu0 0
        %1494 = vmatprep.subr.bf16.mxu0 0
        %1495 = vmatpush2.bf16.msra.mxu0 0
        %1496 = vmatprep.subr.bf16.mxu0 0
        %1497 = vmatpush2.bf16.msra.mxu0 0
        %1498 = vmatprep.subr.bf16.mxu0 0
        %1499 = vmatpush2.bf16.msra.mxu0 0
        %1500 = vmatprep.subr.bf16.mxu0 0
        %1501 = vmatpush2.bf16.msra.mxu0 0
        %1502 = vmatprep.mubr.bf16.mxu0 0
        %1503 = vmatmul.mubr.bf16.gmra.mxu0 %v1468
        %v1504 = vpop.f32.mrf.mxu0
        %v1505 = vadd.f32 %v1448, %v1504
        %v1506 = vpop.f32.mrf.mxu0
        %v1507 = vpop.f32.mrf.mxu0
        %v1508 = vadd.f32 %v1448, %v1507
        %v1509 = vpop.f32.mrf.mxu0
        %1510 = vdwg.mxu0
        %1511 = vst.msk [vmem:[%s608] sm:$0xff] %vm654, %v1505
        %1512 = vst.msk [vmem:[%s608 + $0x8] sm:$0xff] %vm654, %v1508
        %s1513 = sand.u32 %s298, 1
        %s1514 = scalar_lea.sflag [#allocation5], %s1513
        %s1515 = sand.u32 %s298, 1
        %s1516 = smul.addr %s1515, 16
        %s1517 = scalar_lea.vmem [#allocation18], %s1516
        %s1518 = sand.u32 %s324, 1
        %s1519 = scalar_lea.sflag [#allocation20], %s1518
        %s1520 = sand.u32 %s324, 1
        %s1521 = smul.addr %s1520, 32
        %s1522 = scalar_lea.vmem [#allocation19], %s1521
        // Predicated region
        $region101: #{tpu_custom_call.1} parent=63 // pred_check
          %p1523 = pneg %p308
        $region102: #{tpu_custom_call.1} parent=63 // pred_check_branch
          %1525 = sbr.rel (%p1523) target = $region104
        $region103: #{tpu_custom_call.1} parent=63 // pred_region
          %s1527 = ssub.s32 256, 256
          %1528 = vsyncadd %s1514, %s1527
          %s1529 = smul.addr %s39, 2
          %s1530 = smul.addr %s1529, 128
          %s1531 = scalar_lea.hbm %s11, %s1530
          %s1532 = sshll.u32 %s1517, 4
          %s1533 = int_to_ptr.vmem [resolvable:$true] %s1532
          %1538 = dma.vmem_to_hbm [thread:$0]  %s1533, 256, %s1531, %s1514, 128, 128, 8
        $region104: #{tpu_custom_call.1} parent=63 // pred_fallthru
          _
        // Predicated region
        $region105: #{tpu_custom_call.1} parent=63 // pred_check
          %p1539 = pneg %p334
        $region106: #{tpu_custom_call.1} parent=63 // pred_check_branch
          %1541 = sbr.rel (%p1539) target = $region108
        $region107: #{tpu_custom_call.1} parent=63 // pred_region
          %s1543 = ssub.s32 512, 512
          %1544 = vsyncadd %s1519, %s1543
          %s1545 = smul.addr %s39, 8
          %s1546 = smul.addr %s1545, 64
          %s1547 = scalar_lea.hbm %s12, %s1546
          %s1548 = sshll.u32 %s1522, 4
          %s1549 = int_to_ptr.vmem [resolvable:$true] %s1548
          %1554 = dma.vmem_to_hbm [thread:$0]  %s1549, 512, %s1547, %s1519, 64, 64, 4
        $region108: #{tpu_custom_call.1} parent=63 // pred_fallthru
          _
      $region64: #{tpu_custom_call.1} parent=5 // pred_fallthru
        _
      %p1555 = scmp.le.s32.totalorder 2, %s34
      // Predicated region
      $region109: #{tpu_custom_call.1} parent=5 // pred_check
        %p1556 = pneg %p1555
      $region110: #{tpu_custom_call.1} parent=5 // pred_check_branch
        %1558 = sbr.rel (%p1556) target = $region112
      $region111: #{tpu_custom_call.1} parent=5 // pred_region
        %s1559 = ssub.s32 %s34, 2
        // Predicated region
        $region113: #{tpu_custom_call.1} parent=111 // pred_check
          %p1560 = pneg %p314
        $region114: #{tpu_custom_call.1} parent=111 // pred_check_branch
          %1562 = sbr.rel (%p1560) target = $region116
        $region115: #{tpu_custom_call.1} parent=111 // pred_region
          %s1563 = sand.u32 %s299, 1
          %s1564 = scalar_lea.sflag [#allocation5], %s1563
          %s1565 = sand.u32 %s299, 1
          %s1566 = smul.addr %s1565, 16
          %s1567 = scalar_lea.vmem [#allocation18], %s1566
          %1568 = dma.done %s1564, 256
        $region116: #{tpu_custom_call.1} parent=111 // pred_fallthru
          _
        // Predicated region
        $region117: #{tpu_custom_call.1} parent=111 // pred_check
          %p1569 = pneg %p340
        $region118: #{tpu_custom_call.1} parent=111 // pred_check_branch
          %1571 = sbr.rel (%p1569) target = $region120
        $region119: #{tpu_custom_call.1} parent=111 // pred_region
          %s1572 = sand.u32 %s325, 1
          %s1573 = scalar_lea.sflag [#allocation20], %s1572
          %s1574 = sand.u32 %s325, 1
          %s1575 = smul.addr %s1574, 32
          %s1576 = scalar_lea.vmem [#allocation19], %s1575
          %1577 = dma.done %s1573, 512
        $region120: #{tpu_custom_call.1} parent=111 // pred_fallthru
          _
      $region112: #{tpu_custom_call.1} parent=5 // pred_fallthru
        _
    $region6: #{tpu_custom_call.1} parent=1 // loop_footer
      %s38 = sadd.s32 1, %s34
    $region7: #{tpu_custom_call.1} parent=1 // loop_footer_branch
      %33 = sbr.rel target = $region3
    $region8: #{tpu_custom_call.1} parent=1 // loop_exit
      _
    %1578 = vsyncpa [#allocation4], 1
    %s1579 = scalar_lea.sflag [#allocation4], 1
    %1580 = vsyncpa %s1579, 1
    %1581 = vsyncpa [#allocation7], 1
    %s1582 = scalar_lea.sflag [#allocation7], 1
    %1583 = vsyncpa %s1582, 1
    %1584 = vsyncpa [#allocation10], 1
    %1585 = vsyncpa [#allocation13], 1
    %1586 = vsyncpa [#allocation16], 1
    %1587 = vsyncpa [#allocation5], 1
    %s1588 = scalar_lea.sflag [#allocation5], 1
    %1589 = vsyncpa %s1588, 1
    %1590 = vsyncpa [#allocation20], 1
    %s1591 = scalar_lea.sflag [#allocation20], 1
    %1592 = vsyncpa %s1591, 1

</llo_original>
